<compile_context>
chip_gen: v5e
topology: v5e:2x2
jax: 0.10.0
libtpu: 0.0.40
codegen_flags: <defaults>
</compile_context>

<pallas_src>
import functools
import math

import jax
import jax.numpy as jnp
from jax.experimental import pallas as pl
from jax.experimental.pallas import tpu as pltpu

# ---------------------------------------------------------------- config ----
B, S, D, F = 2, 8, 128, 256      # batch, seq, hidden, ffn
VOCAB = 64
NUM_TASKS = 5
RANK = 4
LORA_ALPHA = 4.0
SCALING = LORA_ALPHA / RANK
EPS = 1e-5

# mirrors self._model._adaptation_map in jina-embeddings-v3
ADAPTATION_MAP = {
    "retrieval.query": 0,
    "retrieval.passage": 1,
    "separation": 2,
    "classification": 3,
    "text-matching": 4,
}
TASKS = ["retrieval.query", "retrieval.passage"]


# ----------------------------------------------------------- shared math ----
def _layernorm(h, g, b):
    mu = jnp.mean(h, axis=-1, keepdims=True)
    var = jnp.mean(jnp.square(h - mu), axis=-1, keepdims=True)
    return (h - mu) * jax.lax.rsqrt(var + EPS) * g + b


def _gelu(y):
    # tanh-approximate GELU, f32 elementwise on VPU/EUP
    return 0.5 * y * (1.0 + jnp.tanh(0.7978845608028654 * (y + 0.044715 * y * y * y)))


# ------------------------------------------------------- fused encoder ------
def _fused_encoder_kernel(ids_ref, mask_ref, tok_emb_ref,
                          ln_emb_g_ref, ln_emb_b_ref,
                          wqkv_ref, wo_ref,
                          ln1_g_ref, ln1_b_ref,
                          w1_ref, w2_ref,
                          ln2_g_ref, ln2_b_ref,
                          o_ref, *, seq, vocab, d):
    f32 = jnp.float32
    bf16 = jnp.bfloat16

    ids = ids_ref[...].reshape(seq, 1)          # (S, 1) int32 token ids
    mask = mask_ref[...].reshape(1, seq)        # (1, S) f32 attention mask

    # ---- fused embedding gather: exact f32 one-hot matmul on the MXU ----
    vocab_iota = jax.lax.broadcasted_iota(jnp.int32, (seq, vocab), 1)
    onehot = (vocab_iota == ids).astype(f32)                      # (S, VOCAB)
    x = jnp.dot(onehot, tok_emb_ref[...], preferred_element_type=f32)   # (S, D)

    # ---- embedding LayerNorm ----
    x = _layernorm(x, ln_emb_g_ref[...], ln_emb_b_ref[...])

    # ---- fused Q|K|V projection: one (S, D) x (D, 3D) bf16 matmul ----
    xb = x.astype(bf16)
    qkv = jnp.dot(xb, wqkv_ref[...], preferred_element_type=f32)  # (S, 3D)
    q = qkv[:, :d]
    k = qkv[:, d:2 * d]
    v = qkv[:, 2 * d:]

    # ---- per-example self-attention (1/sqrt(d) already folded into wq) ----
    scores = jax.lax.dot_general(
        q.astype(bf16), k.astype(bf16), (((1,), (1,)), ((), ())),
        preferred_element_type=f32)                               # (S, S)
    scores = jnp.where(mask > 0.5, scores, -1e30)                 # key padding mask
    scores = scores - jnp.max(scores, axis=-1, keepdims=True)
    p = jnp.exp(scores)                                           # f32 softmax
    p = p * pl.reciprocal(jnp.sum(p, axis=-1, keepdims=True), approx=True)
    attn = jnp.dot(p.astype(bf16), v.astype(bf16), preferred_element_type=f32)

    # ---- output projection + residual + LN1 ----
    attn = jnp.dot(attn.astype(bf16), wo_ref[...], preferred_element_type=f32)
    x = _layernorm(attn + x, ln1_g_ref[...], ln1_b_ref[...])

    # ---- feed-forward block (bf16 matmuls, f32 GELU) + residual + LN2 ----
    xb = x.astype(bf16)
    h = jnp.dot(xb, w1_ref[...], preferred_element_type=f32)
    h = _gelu(h)
    h = jnp.dot(h.astype(bf16), w2_ref[...], preferred_element_type=f32)
    x = _layernorm(h + x, ln2_g_ref[...], ln2_b_ref[...])

    # ---- masked mean pooling: full-f32 matmul, exact divide ----
    summed = jnp.dot(mask, x, preferred_element_type=f32)         # (1, D)
    count = jnp.maximum(jnp.sum(mask), 1.0)                       # guard all-pad rows
    o_ref[...] = (summed / count).reshape(1, 1, d).astype(o_ref.dtype)


# ----------------------------------------------------------- parameters -----
def init_params(key):
    ks = jax.random.split(key, 32)
    n = iter(range(32))
    std = 0.02

    def normal(k, shape):
        return (std * jax.random.normal(k, shape)).astype(jnp.float32)

    def lora_pair(k1, k2, d_in, d_out):
        a = normal(k1, (NUM_TASKS, d_in, RANK))
        b = normal(k2, (NUM_TASKS, RANK, d_out))
        return a, b

    p = {}
    p["tok_emb"] = normal(ks[next(n)], (VOCAB, D))
    p["ln_emb_g"] = jnp.ones((1, D), jnp.float32)
    p["ln_emb_b"] = jnp.zeros((1, D), jnp.float32)
    for name, (di, do) in [("q", (D, D)), ("k", (D, D)), ("v", (D, D)), ("o", (D, D))]:
        p[f"w{name}"] = normal(ks[next(n)], (di, do))
        p[f"a{name}"], p[f"b{name}"] = lora_pair(ks[next(n)], ks[next(n)], di, do)
    p["ln1_g"] = jnp.ones((1, D), jnp.float32)
    p["ln1_b"] = jnp.zeros((1, D), jnp.float32)
    p["w1"] = normal(ks[next(n)], (D, F))
    p["a1"], p["b1"] = lora_pair(ks[next(n)], ks[next(n)], D, F)
    p["w2"] = normal(ks[next(n)], (F, D))
    p["a2"], p["b2"] = lora_pair(ks[next(n)], ks[next(n)], F, D)
    p["ln2_g"] = jnp.ones((1, D), jnp.float32)
    p["ln2_b"] = jnp.zeros((1, D), jnp.float32)
    return p


def _merge_lora(w, a, b, task_id):
    # Fold the rank-4 LoRA delta for the (single, homogeneous) task into the
    # base weight, once at trace time.
    return w + SCALING * jnp.dot(a[task_id], b[task_id])


def _merged_weights(params):
    # adapter_mask = full((num_examples,), task_id['retrieval.passage']), so the
    # per-example adapter selection reduces to a single trace-time weight fold.
    # TODO(synk): a heterogeneous adapter_mask batch would need the per-example
    # scalar-prefetch LoRA path instead of this fold.
    task_id = ADAPTATION_MAP[TASKS[1]]
    wq = _merge_lora(params["wq"], params["aq"], params["bq"], task_id)
    wq = wq * jnp.float32(1.0 / math.sqrt(D))          # fold attention scale
    wk = _merge_lora(params["wk"], params["ak"], params["bk"], task_id)
    wv = _merge_lora(params["wv"], params["av"], params["bv"], task_id)
    wqkv = jnp.concatenate([wq, wk, wv], axis=1)        # (D, 3D)
    wo = _merge_lora(params["wo"], params["ao"], params["bo"], task_id)
    w1 = _merge_lora(params["w1"], params["a1"], params["b1"], task_id)
    w2 = _merge_lora(params["w2"], params["a2"], params["b2"], task_id)
    return wqkv, wo, w1, w2


# -------------------------------------------- JinaEmbeddingsV3Wrapper.forward
def jina_v3_wrapper_forward(params, input_ids, attention_mask):
    """Equivalent of wrapper.forward(input_ids=..., attention_mask=...)."""
    bsz, seq = input_ids.shape
    wqkv, wo, w1, w2 = _merged_weights(params)
    wqkv = wqkv.astype(jnp.bfloat16)
    wo = wo.astype(jnp.bfloat16)
    w1 = w1.astype(jnp.bfloat16)
    w2 = w2.astype(jnp.bfloat16)

    ids3 = input_ids.astype(jnp.int32).reshape(bsz, seq, 1)
    mask3 = attention_mask.astype(jnp.float32).reshape(bsz, 1, seq)

    kernel = functools.partial(_fused_encoder_kernel, seq=seq, vocab=VOCAB, d=D)
    full = lambda b: (0, 0)        # constant block index -> stays VMEM-resident
    per_ex = lambda b: (b, 0, 0)

    pooled = pl.pallas_call(
        kernel,
        out_shape=jax.ShapeDtypeStruct((bsz, 1, D), jnp.float32),
        grid=(bsz,),
        in_specs=[
            pl.BlockSpec((1, seq, 1), per_ex),                        # input_ids
            pl.BlockSpec((1, 1, seq), per_ex),                        # attention_mask
            pl.BlockSpec((VOCAB, D), full),                           # token embeddings
            pl.BlockSpec((1, D), full), pl.BlockSpec((1, D), full),   # emb LN
            pl.BlockSpec((D, 3 * D), full),                           # fused QKV
            pl.BlockSpec((D, D), full),                               # output proj
            pl.BlockSpec((1, D), full), pl.BlockSpec((1, D), full),   # LN1
            pl.BlockSpec((D, F), full),                               # FFN up
            pl.BlockSpec((F, D), full),                               # FFN down
            pl.BlockSpec((1, D), full), pl.BlockSpec((1, D), full),   # LN2
        ],
        out_specs=pl.BlockSpec((1, 1, D), per_ex),
        compiler_params=pltpu.CompilerParams(
            dimension_semantics=("parallel",)),   # shards over 2 TCs on v7x
    )(ids3, mask3, params["tok_emb"],
      params["ln_emb_g"], params["ln_emb_b"],
      wqkv, wo,
      params["ln1_g"], params["ln1_b"],
      w1, w2,
      params["ln2_g"], params["ln2_b"])
    return pooled.reshape(bsz, D)                                      # (B, D)


# ------------------------------------------------------ pure-JAX reference --
def jina_v3_reference(params, input_ids, attention_mask):
    bsz, seq = input_ids.shape
    wqkv, wo, w1, w2 = _merged_weights(params)                         # f32 weights
    x = jnp.take(params["tok_emb"], input_ids.reshape(-1), axis=0).reshape(bsz, seq, D)
    x = _layernorm(x, params["ln_emb_g"], params["ln_emb_b"])
    qkv = jnp.einsum("bsd,de->bse", x, wqkv)
    q, k, v = qkv[..., :D], qkv[..., D:2 * D], qkv[..., 2 * D:]
    scores = jnp.einsum("bqd,bkd->bqk", q, k)           # scale folded into wq
    scores = jnp.where(attention_mask[:, None, :] > 0, scores, -1e30)
    p = jax.nn.softmax(scores, axis=-1)
    attn = jnp.einsum("bqk,bkd->bqd", p, v)
    attn = jnp.einsum("bsd,de->bse", attn, wo)
    x = _layernorm(attn + x, params["ln1_g"], params["ln1_b"])
    h = _gelu(jnp.einsum("bsd,df->bsf", x, w1))
    h = jnp.einsum("bsf,fd->bsd", h, w2)
    x = _layernorm(h + x, params["ln2_g"], params["ln2_b"])
    m = attention_mask.astype(jnp.float32)
    summed = jnp.einsum("bs,bsd->bd", m, x)
    count = jnp.maximum(jnp.sum(m, axis=-1, keepdims=True), 1.0)
    return summed / count


# -------------------------------------------------------------------- main --
if __name__ == "__main__":
    key = jax.random.PRNGKey(0)
    k_params, k_ids = jax.random.split(key)
    params = init_params(k_params)

    input_ids = jax.random.randint(k_ids, (B, S), 0, VOCAB, dtype=jnp.int32)
    # example padding: first sequence full, second padded to length 5
    attention_mask = jnp.array(
        [[1, 1, 1, 1, 1, 1, 1, 1],
         [1, 1, 1, 1, 1, 0, 0, 0]], dtype=jnp.int32)

    out = jax.jit(jina_v3_wrapper_forward)(params, input_ids, attention_mask)
    out = jax.block_until_ready(out)
    ref = jina_v3_reference(params, input_ids, attention_mask)

    assert out.shape == (B, D) and out.dtype == jnp.float32
    assert bool(jnp.all(jnp.isfinite(out)))
    assert bool(jnp.allclose(out, ref, atol=5e-2, rtol=5e-2)), (
        "max abs err vs f32 reference: %f" % float(jnp.max(jnp.abs(out - ref))))
    print("KERNEL_OK")
</pallas_src>

<mosaic_0001>
module attributes {stable_mosaic.version = 11 : i64} {
  func.func @_fused_encoder_kernel(%arg0: i32, %arg1: memref<1x8x1xi32, #tpu.memory_space<vmem>>, %arg2: memref<1x1x8xf32, #tpu.memory_space<vmem>>, %arg3: memref<64x128xf32, #tpu.memory_space<vmem>>, %arg4: memref<1x128xf32, #tpu.memory_space<vmem>>, %arg5: memref<1x128xf32, #tpu.memory_space<vmem>>, %arg6: memref<128x384xbf16, #tpu.memory_space<vmem>>, %arg7: memref<128x128xbf16, #tpu.memory_space<vmem>>, %arg8: memref<1x128xf32, #tpu.memory_space<vmem>>, %arg9: memref<1x128xf32, #tpu.memory_space<vmem>>, %arg10: memref<128x256xbf16, #tpu.memory_space<vmem>>, %arg11: memref<256x128xbf16, #tpu.memory_space<vmem>>, %arg12: memref<1x128xf32, #tpu.memory_space<vmem>>, %arg13: memref<1x128xf32, #tpu.memory_space<vmem>>, %arg14: memref<1x1x128xf32, #tpu.memory_space<vmem>>) attributes {dimension_semantics = [#tpu.dimension_semantics<parallel>], iteration_bounds = array<i64: 2>, scalar_prefetch = 0 : i64, scratch_operands = 0 : i64, tpu.core_type = #tpu.core_type<tc>, window_params = [{transform_indices = @transform_0, window_bounds = array<i64: 1, 8, 1>}, {transform_indices = @transform_1, window_bounds = array<i64: 1, 1, 8>}, {pipeline_mode = #tpu.pipeline_mode<synchronous>, transform_indices = @transform_2, window_bounds = array<i64: 64, 128>}, {pipeline_mode = #tpu.pipeline_mode<synchronous>, transform_indices = @transform_3, window_bounds = array<i64: 1, 128>}, {pipeline_mode = #tpu.pipeline_mode<synchronous>, transform_indices = @transform_4, window_bounds = array<i64: 1, 128>}, {pipeline_mode = #tpu.pipeline_mode<synchronous>, transform_indices = @transform_5, window_bounds = array<i64: 128, 384>}, {pipeline_mode = #tpu.pipeline_mode<synchronous>, transform_indices = @transform_6, window_bounds = array<i64: 128, 128>}, {pipeline_mode = #tpu.pipeline_mode<synchronous>, transform_indices = @transform_7, window_bounds = array<i64: 1, 128>}, {pipeline_mode = #tpu.pipeline_mode<synchronous>, transform_indices = @transform_8, window_bounds = array<i64: 1, 128>}, {pipeline_mode = #tpu.pipeline_mode<synchronous>, transform_indices = @transform_9, window_bounds = array<i64: 128, 256>}, {pipeline_mode = #tpu.pipeline_mode<synchronous>, transform_indices = @transform_10, window_bounds = array<i64: 256, 128>}, {pipeline_mode = #tpu.pipeline_mode<synchronous>, transform_indices = @transform_11, window_bounds = array<i64: 1, 128>}, {pipeline_mode = #tpu.pipeline_mode<synchronous>, transform_indices = @transform_12, window_bounds = array<i64: 1, 128>}, {transform_indices = @transform_13, window_bounds = array<i64: 1, 1, 128>}]} {
    %c0 = arith.constant 0 : index
    %c0_0 = arith.constant 0 : index
    %c0_1 = arith.constant 0 : index
    %0 = vector.load %arg1[%c0, %c0_0, %c0_1] : memref<1x8x1xi32, #tpu.memory_space<vmem>>, vector<1x8x1xi32>
    %1 = vector.shape_cast %0 : vector<1x8x1xi32> to vector<8x1xi32>
    %c0_2 = arith.constant 0 : index
    %c0_3 = arith.constant 0 : index
    %c0_4 = arith.constant 0 : index
    %2 = vector.load %arg2[%c0_2, %c0_3, %c0_4] : memref<1x1x8xf32, #tpu.memory_space<vmem>>, vector<1x1x8xf32>
    %3 = vector.shape_cast %2 : vector<1x1x8xf32> to vector<1x8xf32>
    %4 = tpu.iota {dimensions = array<i32: 1>} : vector<8x64xi32>
    %5 = vector.broadcast %1 : vector<8x1xi32> to vector<8x64xi32>
    %6 = arith.cmpi eq, %4, %5 : vector<8x64xi32>
    %7 = arith.extui %6 : vector<8x64xi1> to vector<8x64xi32>
    %8 = arith.sitofp %7 : vector<8x64xi32> to vector<8x64xf32>
    %c0_5 = arith.constant 0 : index
    %c0_6 = arith.constant 0 : index
    %9 = vector.load %arg3[%c0_5, %c0_6] : memref<64x128xf32, #tpu.memory_space<vmem>>, vector<64x128xf32>
    %cst = arith.constant dense<0.000000e+00> : vector<8x128xf32>
    %10 = tpu.matmul %8, %9, %cst {dimension_numbers = #tpu.dot_dimension_numbers<[1], [0], [0], [1], [0, 0, 1, 1], [], []>} : vector<8x64xf32>, vector<64x128xf32>, vector<8x128xf32> -> vector<8x128xf32>
    %c0_7 = arith.constant 0 : index
    %c0_8 = arith.constant 0 : index
    %11 = vector.load %arg4[%c0_7, %c0_8] : memref<1x128xf32, #tpu.memory_space<vmem>>, vector<1x128xf32>
    %c0_9 = arith.constant 0 : index
    %c0_10 = arith.constant 0 : index
    %12 = vector.load %arg5[%c0_9, %c0_10] : memref<1x128xf32, #tpu.memory_space<vmem>>, vector<1x128xf32>
    %cst_11 = arith.constant dense<0.000000e+00> : vector<8xf32>
    %13 = vector.multi_reduction <add>, %10, %cst_11 [1] : vector<8x128xf32> to vector<8xf32>
    %14 = vector.shape_cast %13 : vector<8xf32> to vector<8x1xf32>
    %cst_12 = arith.constant 1.280000e+02 : f32
    %15 = vector.broadcast %cst_12 : f32 to vector<8x1xf32>
    %16 = arith.divf %14, %15 : vector<8x1xf32>
    %17 = vector.broadcast %16 : vector<8x1xf32> to vector<8x128xf32>
    %18 = arith.subf %10, %17 : vector<8x128xf32>
    %19 = arith.mulf %18, %18 : vector<8x128xf32>
    %cst_13 = arith.constant dense<0.000000e+00> : vector<8xf32>
    %20 = vector.multi_reduction <add>, %19, %cst_13 [1] : vector<8x128xf32> to vector<8xf32>
    %21 = vector.shape_cast %20 : vector<8xf32> to vector<8x1xf32>
    %cst_14 = arith.constant 1.280000e+02 : f32
    %22 = vector.broadcast %cst_14 : f32 to vector<8x1xf32>
    %23 = arith.divf %21, %22 : vector<8x1xf32>
    %24 = vector.broadcast %16 : vector<8x1xf32> to vector<8x128xf32>
    %25 = arith.subf %10, %24 : vector<8x128xf32>
    %cst_15 = arith.constant 9.99999974E-6 : f32
    %26 = vector.broadcast %cst_15 : f32 to vector<8x1xf32>
    %27 = arith.addf %23, %26 : vector<8x1xf32>
    %28 = math.rsqrt %27 : vector<8x1xf32>
    %29 = vector.broadcast %28 : vector<8x1xf32> to vector<8x128xf32>
    %30 = arith.mulf %25, %29 : vector<8x128xf32>
    %31 = vector.broadcast %11 : vector<1x128xf32> to vector<8x128xf32>
    %32 = arith.mulf %30, %31 : vector<8x128xf32>
    %33 = vector.broadcast %12 : vector<1x128xf32> to vector<8x128xf32>
    %34 = arith.addf %32, %33 : vector<8x128xf32>
    %35 = arith.truncf %34 : vector<8x128xf32> to vector<8x128xbf16>
    %c0_16 = arith.constant 0 : index
    %c0_17 = arith.constant 0 : index
    %36 = vector.load %arg6[%c0_16, %c0_17] : memref<128x384xbf16, #tpu.memory_space<vmem>>, vector<128x384xbf16>
    %cst_18 = arith.constant dense<0.000000e+00> : vector<8x384xf32>
    %37 = tpu.matmul %35, %36, %cst_18 {dimension_numbers = #tpu.dot_dimension_numbers<[1], [0], [0], [1], [0, 0, 1, 1], [], []>} : vector<8x128xbf16>, vector<128x384xbf16>, vector<8x384xf32> -> vector<8x384xf32>
    %38 = vector.extract_strided_slice %37 {offsets = [0, 0], sizes = [8, 128], strides = [1, 1]} : vector<8x384xf32> to vector<8x128xf32>
    %39 = vector.extract_strided_slice %37 {offsets = [0, 128], sizes = [8, 128], strides = [1, 1]} : vector<8x384xf32> to vector<8x128xf32>
    %40 = vector.extract_strided_slice %37 {offsets = [0, 256], sizes = [8, 128], strides = [1, 1]} : vector<8x384xf32> to vector<8x128xf32>
    %41 = arith.truncf %38 : vector<8x128xf32> to vector<8x128xbf16>
    %42 = arith.truncf %39 : vector<8x128xf32> to vector<8x128xbf16>
    %cst_19 = arith.constant dense<0.000000e+00> : vector<8x8xf32>
    %43 = tpu.matmul %41, %42, %cst_19 {dimension_numbers = #tpu.dot_dimension_numbers<[1], [1], [0], [0], [0, 0, 1, 0], [], []>} : vector<8x128xbf16>, vector<8x128xbf16>, vector<8x8xf32> -> vector<8x8xf32>
    %cst_20 = arith.constant 5.000000e-01 : f32
    %44 = vector.broadcast %cst_20 : f32 to vector<1x8xf32>
    %45 = arith.cmpf ogt, %3, %44 : vector<1x8xf32>
    %cst_21 = arith.constant -1.000000e+30 : f32
    %46 = vector.shape_cast %45 : vector<1x8xi1> to vector<1x8xi1>
    %47 = vector.broadcast %46 : vector<1x8xi1> to vector<8x8xi1>
    %48 = vector.broadcast %cst_21 : f32 to vector<8x8xf32>
    %49 = arith.select %47, %43, %48 : vector<8x8xi1>, vector<8x8xf32>
    %cst_22 = arith.constant dense<0xFF800000> : vector<8xf32>
    %50 = vector.multi_reduction <maximumf>, %49, %cst_22 [1] : vector<8x8xf32> to vector<8xf32>
    %51 = vector.shape_cast %50 : vector<8xf32> to vector<8x1xf32>
    %52 = vector.broadcast %51 : vector<8x1xf32> to vector<8x8xf32>
    %53 = arith.subf %49, %52 : vector<8x8xf32>
    %54 = math.exp %53 : vector<8x8xf32>
    %cst_23 = arith.constant dense<0.000000e+00> : vector<8xf32>
    %55 = vector.multi_reduction <add>, %54, %cst_23 [1] : vector<8x8xf32> to vector<8xf32>
    %56 = vector.shape_cast %55 : vector<8xf32> to vector<8x1xf32>
    %57 = tpu.reciprocal %56 {approx = true} : vector<8x1xf32> -> vector<8x1xf32>
    %58 = vector.broadcast %57 : vector<8x1xf32> to vector<8x8xf32>
    %59 = arith.mulf %54, %58 : vector<8x8xf32>
    %60 = arith.truncf %59 : vector<8x8xf32> to vector<8x8xbf16>
    %61 = arith.truncf %40 : vector<8x128xf32> to vector<8x128xbf16>
    %cst_24 = arith.constant dense<0.000000e+00> : vector<8x128xf32>
    %62 = tpu.matmul %60, %61, %cst_24 {dimension_numbers = #tpu.dot_dimension_numbers<[1], [0], [0], [1], [0, 0, 1, 1], [], []>} : vector<8x8xbf16>, vector<8x128xbf16>, vector<8x128xf32> -> vector<8x128xf32>
    %63 = arith.truncf %62 : vector<8x128xf32> to vector<8x128xbf16>
    %c0_25 = arith.constant 0 : index
    %c0_26 = arith.constant 0 : index
    %64 = vector.load %arg7[%c0_25, %c0_26] : memref<128x128xbf16, #tpu.memory_space<vmem>>, vector<128x128xbf16>
    %cst_27 = arith.constant dense<0.000000e+00> : vector<8x128xf32>
    %65 = tpu.matmul %63, %64, %cst_27 {dimension_numbers = #tpu.dot_dimension_numbers<[1], [0], [0], [1], [0, 0, 1, 1], [], []>} : vector<8x128xbf16>, vector<128x128xbf16>, vector<8x128xf32> -> vector<8x128xf32>
    %66 = arith.addf %65, %34 : vector<8x128xf32>
    %c0_28 = arith.constant 0 : index
    %c0_29 = arith.constant 0 : index
    %67 = vector.load %arg8[%c0_28, %c0_29] : memref<1x128xf32, #tpu.memory_space<vmem>>, vector<1x128xf32>
    %c0_30 = arith.constant 0 : index
    %c0_31 = arith.constant 0 : index
    %68 = vector.load %arg9[%c0_30, %c0_31] : memref<1x128xf32, #tpu.memory_space<vmem>>, vector<1x128xf32>
    %cst_32 = arith.constant dense<0.000000e+00> : vector<8xf32>
    %69 = vector.multi_reduction <add>, %66, %cst_32 [1] : vector<8x128xf32> to vector<8xf32>
    %70 = vector.shape_cast %69 : vector<8xf32> to vector<8x1xf32>
    %cst_33 = arith.constant 1.280000e+02 : f32
    %71 = vector.broadcast %cst_33 : f32 to vector<8x1xf32>
    %72 = arith.divf %70, %71 : vector<8x1xf32>
    %73 = vector.broadcast %72 : vector<8x1xf32> to vector<8x128xf32>
    %74 = arith.subf %66, %73 : vector<8x128xf32>
    %75 = arith.mulf %74, %74 : vector<8x128xf32>
    %cst_34 = arith.constant dense<0.000000e+00> : vector<8xf32>
    %76 = vector.multi_reduction <add>, %75, %cst_34 [1] : vector<8x128xf32> to vector<8xf32>
    %77 = vector.shape_cast %76 : vector<8xf32> to vector<8x1xf32>
    %cst_35 = arith.constant 1.280000e+02 : f32
    %78 = vector.broadcast %cst_35 : f32 to vector<8x1xf32>
    %79 = arith.divf %77, %78 : vector<8x1xf32>
    %80 = vector.broadcast %72 : vector<8x1xf32> to vector<8x128xf32>
    %81 = arith.subf %66, %80 : vector<8x128xf32>
    %cst_36 = arith.constant 9.99999974E-6 : f32
    %82 = vector.broadcast %cst_36 : f32 to vector<8x1xf32>
    %83 = arith.addf %79, %82 : vector<8x1xf32>
    %84 = math.rsqrt %83 : vector<8x1xf32>
    %85 = vector.broadcast %84 : vector<8x1xf32> to vector<8x128xf32>
    %86 = arith.mulf %81, %85 : vector<8x128xf32>
    %87 = vector.broadcast %67 : vector<1x128xf32> to vector<8x128xf32>
    %88 = arith.mulf %86, %87 : vector<8x128xf32>
    %89 = vector.broadcast %68 : vector<1x128xf32> to vector<8x128xf32>
    %90 = arith.addf %88, %89 : vector<8x128xf32>
    %91 = arith.truncf %90 : vector<8x128xf32> to vector<8x128xbf16>
    %c0_37 = arith.constant 0 : index
    %c0_38 = arith.constant 0 : index
    %92 = vector.load %arg10[%c0_37, %c0_38] : memref<128x256xbf16, #tpu.memory_space<vmem>>, vector<128x256xbf16>
    %cst_39 = arith.constant dense<0.000000e+00> : vector<8x256xf32>
    %93 = tpu.matmul %91, %92, %cst_39 {dimension_numbers = #tpu.dot_dimension_numbers<[1], [0], [0], [1], [0, 0, 1, 1], [], []>} : vector<8x128xbf16>, vector<128x256xbf16>, vector<8x256xf32> -> vector<8x256xf32>
    %cst_40 = arith.constant 5.000000e-01 : f32
    %94 = vector.broadcast %cst_40 : f32 to vector<8x256xf32>
    %95 = arith.mulf %94, %93 : vector<8x256xf32>
    %cst_41 = arith.constant 4.471500e-02 : f32
    %96 = vector.broadcast %cst_41 : f32 to vector<8x256xf32>
    %97 = arith.mulf %96, %93 : vector<8x256xf32>
    %98 = arith.mulf %97, %93 : vector<8x256xf32>
    %99 = arith.mulf %98, %93 : vector<8x256xf32>
    %100 = arith.addf %93, %99 : vector<8x256xf32>
    %cst_42 = arith.constant 0.797884583 : f32
    %101 = vector.broadcast %cst_42 : f32 to vector<8x256xf32>
    %102 = arith.mulf %101, %100 : vector<8x256xf32>
    %103 = math.tanh %102 : vector<8x256xf32>
    %cst_43 = arith.constant 1.000000e+00 : f32
    %104 = vector.broadcast %cst_43 : f32 to vector<8x256xf32>
    %105 = arith.addf %104, %103 : vector<8x256xf32>
    %106 = arith.mulf %95, %105 : vector<8x256xf32>
    %107 = arith.truncf %106 : vector<8x256xf32> to vector<8x256xbf16>
    %c0_44 = arith.constant 0 : index
    %c0_45 = arith.constant 0 : index
    %108 = vector.load %arg11[%c0_44, %c0_45] : memref<256x128xbf16, #tpu.memory_space<vmem>>, vector<256x128xbf16>
    %cst_46 = arith.constant dense<0.000000e+00> : vector<8x128xf32>
    %109 = tpu.matmul %107, %108, %cst_46 {dimension_numbers = #tpu.dot_dimension_numbers<[1], [0], [0], [1], [0, 0, 1, 1], [], []>} : vector<8x256xbf16>, vector<256x128xbf16>, vector<8x128xf32> -> vector<8x128xf32>
    %110 = arith.addf %109, %90 : vector<8x128xf32>
    %c0_47 = arith.constant 0 : index
    %c0_48 = arith.constant 0 : index
    %111 = vector.load %arg12[%c0_47, %c0_48] : memref<1x128xf32, #tpu.memory_space<vmem>>, vector<1x128xf32>
    %c0_49 = arith.constant 0 : index
    %c0_50 = arith.constant 0 : index
    %112 = vector.load %arg13[%c0_49, %c0_50] : memref<1x128xf32, #tpu.memory_space<vmem>>, vector<1x128xf32>
    %cst_51 = arith.constant dense<0.000000e+00> : vector<8xf32>
    %113 = vector.multi_reduction <add>, %110, %cst_51 [1] : vector<8x128xf32> to vector<8xf32>
    %114 = vector.shape_cast %113 : vector<8xf32> to vector<8x1xf32>
    %cst_52 = arith.constant 1.280000e+02 : f32
    %115 = vector.broadcast %cst_52 : f32 to vector<8x1xf32>
    %116 = arith.divf %114, %115 : vector<8x1xf32>
    %117 = vector.broadcast %116 : vector<8x1xf32> to vector<8x128xf32>
    %118 = arith.subf %110, %117 : vector<8x128xf32>
    %119 = arith.mulf %118, %118 : vector<8x128xf32>
    %cst_53 = arith.constant dense<0.000000e+00> : vector<8xf32>
    %120 = vector.multi_reduction <add>, %119, %cst_53 [1] : vector<8x128xf32> to vector<8xf32>
    %121 = vector.shape_cast %120 : vector<8xf32> to vector<8x1xf32>
    %cst_54 = arith.constant 1.280000e+02 : f32
    %122 = vector.broadcast %cst_54 : f32 to vector<8x1xf32>
    %123 = arith.divf %121, %122 : vector<8x1xf32>
    %124 = vector.broadcast %116 : vector<8x1xf32> to vector<8x128xf32>
    %125 = arith.subf %110, %124 : vector<8x128xf32>
    %cst_55 = arith.constant 9.99999974E-6 : f32
    %126 = vector.broadcast %cst_55 : f32 to vector<8x1xf32>
    %127 = arith.addf %123, %126 : vector<8x1xf32>
    %128 = math.rsqrt %127 : vector<8x1xf32>
    %129 = vector.broadcast %128 : vector<8x1xf32> to vector<8x128xf32>
    %130 = arith.mulf %125, %129 : vector<8x128xf32>
    %131 = vector.broadcast %111 : vector<1x128xf32> to vector<8x128xf32>
    %132 = arith.mulf %130, %131 : vector<8x128xf32>
    %133 = vector.broadcast %112 : vector<1x128xf32> to vector<8x128xf32>
    %134 = arith.addf %132, %133 : vector<8x128xf32>
    %cst_56 = arith.constant dense<0.000000e+00> : vector<1x128xf32>
    %135 = tpu.matmul %3, %134, %cst_56 {dimension_numbers = #tpu.dot_dimension_numbers<[1], [0], [0], [1], [0, 0, 1, 1], [], []>} : vector<1x8xf32>, vector<8x128xf32>, vector<1x128xf32> -> vector<1x128xf32>
    %136 = vector.shape_cast %3 : vector<1x8xf32> to vector<1x1x8xf32>
    %cst_57 = arith.constant dense<0.000000e+00> : vector<1xf32>
    %137 = vector.multi_reduction <add>, %136, %cst_57 [1, 2] : vector<1x1x8xf32> to vector<1xf32>
    %138 = vector.shape_cast %137 : vector<1xf32> to vector<1x1x1xf32>
    %139 = vector.extract %138[0, 0, 0] : f32 from vector<1x1x1xf32>
    %cst_58 = arith.constant 1.000000e+00 : f32
    %140 = arith.maximumf %139, %cst_58 : f32
    %141 = vector.broadcast %140 : f32 to vector<1x128xf32>
    %142 = arith.divf %135, %141 : vector<1x128xf32>
    %143 = vector.shape_cast %142 : vector<1x128xf32> to vector<1x1x128xf32>
    %c0_59 = arith.constant 0 : index
    %c0_60 = arith.constant 0 : index
    %c0_61 = arith.constant 0 : index
    %144 = vector.load %arg14[%c0_59, %c0_60, %c0_61] : memref<1x1x128xf32, #tpu.memory_space<vmem>>, vector<1x1x128xf32>
    tpu.vector_store %arg14[%c0_59, %c0_60, %c0_61], %143 {strides = array<i32>} : memref<1x1x128xf32, #tpu.memory_space<vmem>>, vector<1x1x128xf32>,
    return
  }
  func.func @transform_0(%arg0: i32) -> (i32, i32, i32) {
    %c0_i32 = arith.constant 0 : i32
    %c0_i32_0 = arith.constant 0 : i32
    %c0_i32_1 = arith.constant 0 : i32
    return %arg0, %c0_i32, %c0_i32_0 : i32, i32, i32
  }
  func.func @transform_1(%arg0: i32) -> (i32, i32, i32) {
    %c0_i32 = arith.constant 0 : i32
    %c0_i32_0 = arith.constant 0 : i32
    %c0_i32_1 = arith.constant 0 : i32
    return %arg0, %c0_i32, %c0_i32_0 : i32, i32, i32
  }
  func.func @transform_2(%arg0: i32) -> (i32, i32) {
    %c0_i32 = arith.constant 0 : i32
    %c0_i32_0 = arith.constant 0 : i32
    %c0_i32_1 = arith.constant 0 : i32
    return %c0_i32, %c0_i32_0 : i32, i32
  }
  func.func @transform_3(%arg0: i32) -> (i32, i32) {
    %c0_i32 = arith.constant 0 : i32
    %c0_i32_0 = arith.constant 0 : i32
    %c0_i32_1 = arith.constant 0 : i32
    return %c0_i32, %c0_i32_0 : i32, i32
  }
  func.func @transform_4(%arg0: i32) -> (i32, i32) {
    %c0_i32 = arith.constant 0 : i32
    %c0_i32_0 = arith.constant 0 : i32
    %c0_i32_1 = arith.constant 0 : i32
    return %c0_i32, %c0_i32_0 : i32, i32
  }
  func.func @transform_5(%arg0: i32) -> (i32, i32) {
    %c0_i32 = arith.constant 0 : i32
    %c0_i32_0 = arith.constant 0 : i32
    %c0_i32_1 = arith.constant 0 : i32
    return %c0_i32, %c0_i32_0 : i32, i32
  }
  func.func @transform_6(%arg0: i32) -> (i32, i32) {
    %c0_i32 = arith.constant 0 : i32
    %c0_i32_0 = arith.constant 0 : i32
    %c0_i32_1 = arith.constant 0 : i32
    return %c0_i32, %c0_i32_0 : i32, i32
  }
  func.func @transform_7(%arg0: i32) -> (i32, i32) {
    %c0_i32 = arith.constant 0 : i32
    %c0_i32_0 = arith.constant 0 : i32
    %c0_i32_1 = arith.constant 0 : i32
    return %c0_i32, %c0_i32_0 : i32, i32
  }
  func.func @transform_8(%arg0: i32) -> (i32, i32) {
    %c0_i32 = arith.constant 0 : i32
    %c0_i32_0 = arith.constant 0 : i32
    %c0_i32_1 = arith.constant 0 : i32
    return %c0_i32, %c0_i32_0 : i32, i32
  }
  func.func @transform_9(%arg0: i32) -> (i32, i32) {
    %c0_i32 = arith.constant 0 : i32
    %c0_i32_0 = arith.constant 0 : i32
    %c0_i32_1 = arith.constant 0 : i32
    return %c0_i32, %c0_i32_0 : i32, i32
  }
  func.func @transform_10(%arg0: i32) -> (i32, i32) {
    %c0_i32 = arith.constant 0 : i32
    %c0_i32_0 = arith.constant 0 : i32
    %c0_i32_1 = arith.constant 0 : i32
    return %c0_i32, %c0_i32_0 : i32, i32
  }
  func.func @transform_11(%arg0: i32) -> (i32, i32) {
    %c0_i32 = arith.constant 0 : i32
    %c0_i32_0 = arith.constant 0 : i32
    %c0_i32_1 = arith.constant 0 : i32
    return %c0_i32, %c0_i32_0 : i32, i32
  }
  func.func @transform_12(%arg0: i32) -> (i32, i32) {
    %c0_i32 = arith.constant 0 : i32
    %c0_i32_0 = arith.constant 0 : i32
    %c0_i32_1 = arith.constant 0 : i32
    return %c0_i32, %c0_i32_0 : i32, i32
  }
  func.func @transform_13(%arg0: i32) -> (i32, i32, i32) {
    %c0_i32 = arith.constant 0 : i32
    %c0_i32_0 = arith.constant 0 : i32
    %c0_i32_1 = arith.constant 0 : i32
    return %arg0, %c0_i32, %c0_i32_0 : i32, i32, i32
  }
}

</mosaic_0001>

<llo_original>
// kernel: jina_v3_wrapper_forward.1
$region0: #{jina_v3_wrapper_forward.1}
  #allocation0 [shape = 'u32[]', space=smem, size = 0x4, offset = 0x4, fixed_abs, tag = 'smem constant byte address 0x4 - core index']
  #allocation1 [shape = 'u32[72,128]{1,0:T(1,128)}', space=vmem, size = 0x9000, scoped, tag = 'internal scratch']
  %s0 = inlined_call_operand.vmem [shape: s32[2,8,1], index: 0, kind: input, shape index: {}]
  %s1 = inlined_call_operand.vmem [shape: f32[2,1,8], index: 1, kind: input, shape index: {}]
  %s2 = inlined_call_operand.vmem [shape: f32[64,128], index: 2, kind: input, shape index: {}]
  %s3 = inlined_call_operand.vmem [shape: f32[1,128], index: 3, kind: input, shape index: {}]
  %s4 = inlined_call_operand.vmem [shape: f32[1,128], index: 4, kind: input, shape index: {}]
  %s5 = inlined_call_operand.vmem [shape: bf16[128,384], index: 5, kind: input, shape index: {}]
  %s6 = inlined_call_operand.vmem [shape: bf16[128,128], index: 6, kind: input, shape index: {}]
  %s7 = inlined_call_operand.vmem [shape: f32[1,128], index: 7, kind: input, shape index: {}]
  %s8 = inlined_call_operand.vmem [shape: f32[1,128], index: 8, kind: input, shape index: {}]
  %s9 = inlined_call_operand.vmem [shape: bf16[128,256], index: 9, kind: input, shape index: {}]
  %s10 = inlined_call_operand.vmem [shape: bf16[256,128], index: 10, kind: input, shape index: {}]
  %s11 = inlined_call_operand.vmem [shape: f32[1,128], index: 11, kind: input, shape index: {}]
  %s12 = inlined_call_operand.vmem [shape: f32[1,128], index: 12, kind: input, shape index: {}]
  %s13 = inlined_call_operand.hbm [shape: f32[2,1,128], index: 13, kind: output, shape index: {}]
  %s14 = sld [smem:[#allocation0]]
  $region85: #{jina_v3_wrapper_forward.1} parent=0
    _
  %s16 = ssub.s32 1, %s14
  %s17 = scalar_select 0, %s16, %s14
  $region1: #{jina_v3_wrapper_forward.1} parent=0
    #allocation2 [shape = 'u8[1024]{0}', space=vmem, size = 0x400, scoped, tag = 'output window, operand 0']
    #allocation3 [shape = 's32[2]{0}', space=sflag, size = 0x8, scoped, tag = 'scoped memory for jina_v3_wrapper_forward.1']
    %18 = vsyncpa [#allocation3], 0
    %s19 = scalar_lea.sflag [#allocation3], 1
    %20 = vsyncpa %s19, 0
    loop: start=0, step=1, limit=4
    $region2: #{jina_v3_wrapper_forward.1} parent=1 // loop_pre_header
      _
    $region3: #{jina_v3_wrapper_forward.1} parent=1 // loop_header
      %s22 = sphi 0, %s26
      %p23 = scmp.ge.s32.totalorder %s22, 4
      %s32 = sphi 0, %s34
      %s35 = sphi 0, %s32
      %s36 = sphi 0, %s35
      %s52 = sphi 0, %s36
      %s58 = sphi 0, %s60
      %s61 = sphi 0, %s58
      %s62 = sphi 0, %s61
      %s78 = sphi 0, %s62
      %s82 = sphi 0, %s82
      %s84 = sphi 0, %s82
      %s85 = sphi 0, %s84
      %s99 = sphi 0, %s85
      %s103 = sphi 0, %s103
      %s105 = sphi 0, %s103
      %s106 = sphi 0, %s105
      %s120 = sphi 0, %s106
      %s124 = sphi 0, %s124
      %s126 = sphi 0, %s124
      %s127 = sphi 0, %s126
      %s141 = sphi 0, %s127
      %s145 = sphi 0, %s145
      %s147 = sphi 0, %s145
      %s148 = sphi 0, %s147
      %s162 = sphi 0, %s148
      %s166 = sphi 0, %s166
      %s168 = sphi 0, %s166
      %s169 = sphi 0, %s168
      %s183 = sphi 0, %s169
      %s187 = sphi 0, %s187
      %s189 = sphi 0, %s187
      %s190 = sphi 0, %s189
      %s204 = sphi 0, %s190
      %s208 = sphi 0, %s208
      %s210 = sphi 0, %s208
      %s211 = sphi 0, %s210
      %s225 = sphi 0, %s211
      %s229 = sphi 0, %s229
      %s231 = sphi 0, %s229
      %s232 = sphi 0, %s231
      %s246 = sphi 0, %s232
      %s250 = sphi 0, %s250
      %s252 = sphi 0, %s250
      %s253 = sphi 0, %s252
      %s267 = sphi 0, %s253
      %s271 = sphi 0, %s271
      %s273 = sphi 0, %s271
      %s274 = sphi 0, %s273
      %s288 = sphi 0, %s274
      %s292 = sphi 0, %s292
      %s294 = sphi 0, %s292
      %s295 = sphi 0, %s294
      %s309 = sphi 0, %s295
      %s315 = sphi 0, %s317
      %s318 = sphi 0, %s315
      %s319 = sphi 0, %s318
      %s335 = sphi 0, %s319
    $region4: #{jina_v3_wrapper_forward.1} parent=1 // loop_header_branch
      %25 = sbr.rel (%p23) target = $region8
    $region5: #{jina_v3_wrapper_forward.1} parent=1 // loop_body
      %s27 = ssub.s32 %s22, 1
      %s28 = ssub.s32 %s22, 2
      %s29 = sadd.s32 %s22, 1
      %s30 = ssub.s32 %s22, %s29
      %p31 = scmp.eq.s32.totalorder %s30, 0
      %s33 = sadd.s32 %s32, 1
      %s34 = scalar_select %p31, %s32, %s33
      %p37 = pneg %p31
      %p38 = scmp.eq.s32.totalorder %s22, 1
      %p39 = por %p37, %p38
      %p40 = scmp.ne.s32.totalorder %s32, %s35
      %p41 = scmp.eq.s32.totalorder %s22, 0
      %p42 = por %p40, %p41
      %p43 = scmp.ne.s32.totalorder %s32, %s35
      %p44 = scmp.eq.s32.totalorder %s27, 1
      %p45 = por %p43, %p44
      %p46 = scmp.ne.s32.totalorder %s35, %s36
      %p47 = scmp.eq.s32.totalorder %s27, 0
      %p48 = por %p46, %p47
      %p49 = scmp.ne.s32.totalorder %s35, %s36
      %p50 = scmp.eq.s32.totalorder %s28, 1
      %p51 = por %p49, %p50
      %p53 = scmp.ne.s32.totalorder %s36, %s52
      %p54 = scmp.eq.s32.totalorder %s28, 0
      %p55 = por %p53, %p54
      %s56 = ssub.s32 %s22, %s29
      %p57 = scmp.eq.s32.totalorder %s56, 0
      %s59 = sadd.s32 %s58, 1
      %s60 = scalar_select %p57, %s58, %s59
      %p63 = pneg %p57
      %p64 = scmp.eq.s32.totalorder %s22, 1
      %p65 = por %p63, %p64
      %p66 = scmp.ne.s32.totalorder %s58, %s61
      %p67 = scmp.eq.s32.totalorder %s22, 0
      %p68 = por %p66, %p67
      %p69 = scmp.ne.s32.totalorder %s58, %s61
      %p70 = scmp.eq.s32.totalorder %s27, 1
      %p71 = por %p69, %p70
      %p72 = scmp.ne.s32.totalorder %s61, %s62
      %p73 = scmp.eq.s32.totalorder %s27, 0
      %p74 = por %p72, %p73
      %p75 = scmp.ne.s32.totalorder %s61, %s62
      %p76 = scmp.eq.s32.totalorder %s28, 1
      %p77 = por %p75, %p76
      %p79 = scmp.ne.s32.totalorder %s62, %s78
      %p80 = scmp.eq.s32.totalorder %s28, 0
      %p81 = por %p79, %p80
      %s83 = sadd.s32 %s82, 1
      %p86 = scmp.eq.s32.totalorder %s22, 1
      %p87 = scmp.ne.s32.totalorder %s82, %s84
      %p88 = scmp.eq.s32.totalorder %s22, 0
      %p89 = por %p87, %p88
      %p90 = scmp.ne.s32.totalorder %s82, %s84
      %p91 = scmp.eq.s32.totalorder %s27, 1
      %p92 = por %p90, %p91
      %p93 = scmp.ne.s32.totalorder %s84, %s85
      %p94 = scmp.eq.s32.totalorder %s27, 0
      %p95 = por %p93, %p94
      %p96 = scmp.ne.s32.totalorder %s84, %s85
      %p97 = scmp.eq.s32.totalorder %s28, 1
      %p98 = por %p96, %p97
      %p100 = scmp.ne.s32.totalorder %s85, %s99
      %p101 = scmp.eq.s32.totalorder %s28, 0
      %p102 = por %p100, %p101
      %s104 = sadd.s32 %s103, 1
      %p107 = scmp.eq.s32.totalorder %s22, 1
      %p108 = scmp.ne.s32.totalorder %s103, %s105
      %p109 = scmp.eq.s32.totalorder %s22, 0
      %p110 = por %p108, %p109
      %p111 = scmp.ne.s32.totalorder %s103, %s105
      %p112 = scmp.eq.s32.totalorder %s27, 1
      %p113 = por %p111, %p112
      %p114 = scmp.ne.s32.totalorder %s105, %s106
      %p115 = scmp.eq.s32.totalorder %s27, 0
      %p116 = por %p114, %p115
      %p117 = scmp.ne.s32.totalorder %s105, %s106
      %p118 = scmp.eq.s32.totalorder %s28, 1
      %p119 = por %p117, %p118
      %p121 = scmp.ne.s32.totalorder %s106, %s120
      %p122 = scmp.eq.s32.totalorder %s28, 0
      %p123 = por %p121, %p122
      %s125 = sadd.s32 %s124, 1
      %p128 = scmp.eq.s32.totalorder %s22, 1
      %p129 = scmp.ne.s32.totalorder %s124, %s126
      %p130 = scmp.eq.s32.totalorder %s22, 0
      %p131 = por %p129, %p130
      %p132 = scmp.ne.s32.totalorder %s124, %s126
      %p133 = scmp.eq.s32.totalorder %s27, 1
      %p134 = por %p132, %p133
      %p135 = scmp.ne.s32.totalorder %s126, %s127
      %p136 = scmp.eq.s32.totalorder %s27, 0
      %p137 = por %p135, %p136
      %p138 = scmp.ne.s32.totalorder %s126, %s127
      %p139 = scmp.eq.s32.totalorder %s28, 1
      %p140 = por %p138, %p139
      %p142 = scmp.ne.s32.totalorder %s127, %s141
      %p143 = scmp.eq.s32.totalorder %s28, 0
      %p144 = por %p142, %p143
      %s146 = sadd.s32 %s145, 1
      %p149 = scmp.eq.s32.totalorder %s22, 1
      %p150 = scmp.ne.s32.totalorder %s145, %s147
      %p151 = scmp.eq.s32.totalorder %s22, 0
      %p152 = por %p150, %p151
      %p153 = scmp.ne.s32.totalorder %s145, %s147
      %p154 = scmp.eq.s32.totalorder %s27, 1
      %p155 = por %p153, %p154
      %p156 = scmp.ne.s32.totalorder %s147, %s148
      %p157 = scmp.eq.s32.totalorder %s27, 0
      %p158 = por %p156, %p157
      %p159 = scmp.ne.s32.totalorder %s147, %s148
      %p160 = scmp.eq.s32.totalorder %s28, 1
      %p161 = por %p159, %p160
      %p163 = scmp.ne.s32.totalorder %s148, %s162
      %p164 = scmp.eq.s32.totalorder %s28, 0
      %p165 = por %p163, %p164
      %s167 = sadd.s32 %s166, 1
      %p170 = scmp.eq.s32.totalorder %s22, 1
      %p171 = scmp.ne.s32.totalorder %s166, %s168
      %p172 = scmp.eq.s32.totalorder %s22, 0
      %p173 = por %p171, %p172
      %p174 = scmp.ne.s32.totalorder %s166, %s168
      %p175 = scmp.eq.s32.totalorder %s27, 1
      %p176 = por %p174, %p175
      %p177 = scmp.ne.s32.totalorder %s168, %s169
      %p178 = scmp.eq.s32.totalorder %s27, 0
      %p179 = por %p177, %p178
      %p180 = scmp.ne.s32.totalorder %s168, %s169
      %p181 = scmp.eq.s32.totalorder %s28, 1
      %p182 = por %p180, %p181
      %p184 = scmp.ne.s32.totalorder %s169, %s183
      %p185 = scmp.eq.s32.totalorder %s28, 0
      %p186 = por %p184, %p185
      %s188 = sadd.s32 %s187, 1
      %p191 = scmp.eq.s32.totalorder %s22, 1
      %p192 = scmp.ne.s32.totalorder %s187, %s189
      %p193 = scmp.eq.s32.totalorder %s22, 0
      %p194 = por %p192, %p193
      %p195 = scmp.ne.s32.totalorder %s187, %s189
      %p196 = scmp.eq.s32.totalorder %s27, 1
      %p197 = por %p195, %p196
      %p198 = scmp.ne.s32.totalorder %s189, %s190
      %p199 = scmp.eq.s32.totalorder %s27, 0
      %p200 = por %p198, %p199
      %p201 = scmp.ne.s32.totalorder %s189, %s190
      %p202 = scmp.eq.s32.totalorder %s28, 1
      %p203 = por %p201, %p202
      %p205 = scmp.ne.s32.totalorder %s190, %s204
      %p206 = scmp.eq.s32.totalorder %s28, 0
      %p207 = por %p205, %p206
      %s209 = sadd.s32 %s208, 1
      %p212 = scmp.eq.s32.totalorder %s22, 1
      %p213 = scmp.ne.s32.totalorder %s208, %s210
      %p214 = scmp.eq.s32.totalorder %s22, 0
      %p215 = por %p213, %p214
      %p216 = scmp.ne.s32.totalorder %s208, %s210
      %p217 = scmp.eq.s32.totalorder %s27, 1
      %p218 = por %p216, %p217
      %p219 = scmp.ne.s32.totalorder %s210, %s211
      %p220 = scmp.eq.s32.totalorder %s27, 0
      %p221 = por %p219, %p220
      %p222 = scmp.ne.s32.totalorder %s210, %s211
      %p223 = scmp.eq.s32.totalorder %s28, 1
      %p224 = por %p222, %p223
      %p226 = scmp.ne.s32.totalorder %s211, %s225
      %p227 = scmp.eq.s32.totalorder %s28, 0
      %p228 = por %p226, %p227
      %s230 = sadd.s32 %s229, 1
      %p233 = scmp.eq.s32.totalorder %s22, 1
      %p234 = scmp.ne.s32.totalorder %s229, %s231
      %p235 = scmp.eq.s32.totalorder %s22, 0
      %p236 = por %p234, %p235
      %p237 = scmp.ne.s32.totalorder %s229, %s231
      %p238 = scmp.eq.s32.totalorder %s27, 1
      %p239 = por %p237, %p238
      %p240 = scmp.ne.s32.totalorder %s231, %s232
      %p241 = scmp.eq.s32.totalorder %s27, 0
      %p242 = por %p240, %p241
      %p243 = scmp.ne.s32.totalorder %s231, %s232
      %p244 = scmp.eq.s32.totalorder %s28, 1
      %p245 = por %p243, %p244
      %p247 = scmp.ne.s32.totalorder %s232, %s246
      %p248 = scmp.eq.s32.totalorder %s28, 0
      %p249 = por %p247, %p248
      %s251 = sadd.s32 %s250, 1
      %p254 = scmp.eq.s32.totalorder %s22, 1
      %p255 = scmp.ne.s32.totalorder %s250, %s252
      %p256 = scmp.eq.s32.totalorder %s22, 0
      %p257 = por %p255, %p256
      %p258 = scmp.ne.s32.totalorder %s250, %s252
      %p259 = scmp.eq.s32.totalorder %s27, 1
      %p260 = por %p258, %p259
      %p261 = scmp.ne.s32.totalorder %s252, %s253
      %p262 = scmp.eq.s32.totalorder %s27, 0
      %p263 = por %p261, %p262
      %p264 = scmp.ne.s32.totalorder %s252, %s253
      %p265 = scmp.eq.s32.totalorder %s28, 1
      %p266 = por %p264, %p265
      %p268 = scmp.ne.s32.totalorder %s253, %s267
      %p269 = scmp.eq.s32.totalorder %s28, 0
      %p270 = por %p268, %p269
      %s272 = sadd.s32 %s271, 1
      %p275 = scmp.eq.s32.totalorder %s22, 1
      %p276 = scmp.ne.s32.totalorder %s271, %s273
      %p277 = scmp.eq.s32.totalorder %s22, 0
      %p278 = por %p276, %p277
      %p279 = scmp.ne.s32.totalorder %s271, %s273
      %p280 = scmp.eq.s32.totalorder %s27, 1
      %p281 = por %p279, %p280
      %p282 = scmp.ne.s32.totalorder %s273, %s274
      %p283 = scmp.eq.s32.totalorder %s27, 0
      %p284 = por %p282, %p283
      %p285 = scmp.ne.s32.totalorder %s273, %s274
      %p286 = scmp.eq.s32.totalorder %s28, 1
      %p287 = por %p285, %p286
      %p289 = scmp.ne.s32.totalorder %s274, %s288
      %p290 = scmp.eq.s32.totalorder %s28, 0
      %p291 = por %p289, %p290
      %s293 = sadd.s32 %s292, 1
      %p296 = scmp.eq.s32.totalorder %s22, 1
      %p297 = scmp.ne.s32.totalorder %s292, %s294
      %p298 = scmp.eq.s32.totalorder %s22, 0
      %p299 = por %p297, %p298
      %p300 = scmp.ne.s32.totalorder %s292, %s294
      %p301 = scmp.eq.s32.totalorder %s27, 1
      %p302 = por %p300, %p301
      %p303 = scmp.ne.s32.totalorder %s294, %s295
      %p304 = scmp.eq.s32.totalorder %s27, 0
      %p305 = por %p303, %p304
      %p306 = scmp.ne.s32.totalorder %s294, %s295
      %p307 = scmp.eq.s32.totalorder %s28, 1
      %p308 = por %p306, %p307
      %p310 = scmp.ne.s32.totalorder %s295, %s309
      %p311 = scmp.eq.s32.totalorder %s28, 0
      %p312 = por %p310, %p311
      %s313 = ssub.s32 %s22, %s29
      %p314 = scmp.eq.s32.totalorder %s313, 0
      %s316 = sadd.s32 %s315, 1
      %s317 = scalar_select %p314, %s315, %s316
      %p320 = pneg %p314
      %p321 = scmp.eq.s32.totalorder %s22, 1
      %p322 = por %p320, %p321
      %p323 = scmp.ne.s32.totalorder %s315, %s318
      %p324 = scmp.eq.s32.totalorder %s22, 0
      %p325 = por %p323, %p324
      %p326 = scmp.ne.s32.totalorder %s315, %s318
      %p327 = scmp.eq.s32.totalorder %s27, 1
      %p328 = por %p326, %p327
      %p329 = scmp.ne.s32.totalorder %s318, %s319
      %p330 = scmp.eq.s32.totalorder %s27, 0
      %p331 = por %p329, %p330
      %p332 = scmp.ne.s32.totalorder %s318, %s319
      %p333 = scmp.eq.s32.totalorder %s28, 1
      %p334 = por %p332, %p333
      %p336 = scmp.ne.s32.totalorder %s319, %s335
      %p337 = scmp.eq.s32.totalorder %s28, 0
      %p338 = por %p336, %p337
      %p339 = scmp.le.s32.totalorder 1, %s22
      %p340 = scmp.lt.s32.totalorder %s22, 3
      %p341 = pnand %p339, %p340
      %p342 = pneg %p341
      // Predicated region
      $region9: #{jina_v3_wrapper_forward.1} parent=5 // pred_check
        _
      $region10: #{jina_v3_wrapper_forward.1} parent=5 // pred_check_branch
        %344 = sbr.rel (%p341) target = $region12
      $region11: #{jina_v3_wrapper_forward.1} parent=5 // pred_region
        %s345 = ssub.s32 %s22, 1
        // Predicated region
        $region13: #{jina_v3_wrapper_forward.1} parent=11 // pred_check
          %p346 = pneg %p95
        $region14: #{jina_v3_wrapper_forward.1} parent=11 // pred_check_branch
          %348 = sbr.rel (%p346) target = $region16
        $region15: #{jina_v3_wrapper_forward.1} parent=11 // pred_region
          _
        $region16: #{jina_v3_wrapper_forward.1} parent=11 // pred_fallthru
          _
        // Predicated region
        $region17: #{jina_v3_wrapper_forward.1} parent=11 // pred_check
          %p349 = pneg %p116
        $region18: #{jina_v3_wrapper_forward.1} parent=11 // pred_check_branch
          %351 = sbr.rel (%p349) target = $region20
        $region19: #{jina_v3_wrapper_forward.1} parent=11 // pred_region
          _
        $region20: #{jina_v3_wrapper_forward.1} parent=11 // pred_fallthru
          _
        // Predicated region
        $region21: #{jina_v3_wrapper_forward.1} parent=11 // pred_check
          %p352 = pneg %p137
        $region22: #{jina_v3_wrapper_forward.1} parent=11 // pred_check_branch
          %354 = sbr.rel (%p352) target = $region24
        $region23: #{jina_v3_wrapper_forward.1} parent=11 // pred_region
          _
        $region24: #{jina_v3_wrapper_forward.1} parent=11 // pred_fallthru
          _
        // Predicated region
        $region25: #{jina_v3_wrapper_forward.1} parent=11 // pred_check
          %p355 = pneg %p158
        $region26: #{jina_v3_wrapper_forward.1} parent=11 // pred_check_branch
          %357 = sbr.rel (%p355) target = $region28
        $region27: #{jina_v3_wrapper_forward.1} parent=11 // pred_region
          _
        $region28: #{jina_v3_wrapper_forward.1} parent=11 // pred_fallthru
          _
        // Predicated region
        $region29: #{jina_v3_wrapper_forward.1} parent=11 // pred_check
          %p358 = pneg %p179
        $region30: #{jina_v3_wrapper_forward.1} parent=11 // pred_check_branch
          %360 = sbr.rel (%p358) target = $region32
        $region31: #{jina_v3_wrapper_forward.1} parent=11 // pred_region
          _
        $region32: #{jina_v3_wrapper_forward.1} parent=11 // pred_fallthru
          _
        // Predicated region
        $region33: #{jina_v3_wrapper_forward.1} parent=11 // pred_check
          %p361 = pneg %p200
        $region34: #{jina_v3_wrapper_forward.1} parent=11 // pred_check_branch
          %363 = sbr.rel (%p361) target = $region36
        $region35: #{jina_v3_wrapper_forward.1} parent=11 // pred_region
          _
        $region36: #{jina_v3_wrapper_forward.1} parent=11 // pred_fallthru
          _
        // Predicated region
        $region37: #{jina_v3_wrapper_forward.1} parent=11 // pred_check
          %p364 = pneg %p221
        $region38: #{jina_v3_wrapper_forward.1} parent=11 // pred_check_branch
          %366 = sbr.rel (%p364) target = $region40
        $region39: #{jina_v3_wrapper_forward.1} parent=11 // pred_region
          _
        $region40: #{jina_v3_wrapper_forward.1} parent=11 // pred_fallthru
          _
        // Predicated region
        $region41: #{jina_v3_wrapper_forward.1} parent=11 // pred_check
          %p367 = pneg %p242
        $region42: #{jina_v3_wrapper_forward.1} parent=11 // pred_check_branch
          %369 = sbr.rel (%p367) target = $region44
        $region43: #{jina_v3_wrapper_forward.1} parent=11 // pred_region
          _
        $region44: #{jina_v3_wrapper_forward.1} parent=11 // pred_fallthru
          _
        // Predicated region
        $region45: #{jina_v3_wrapper_forward.1} parent=11 // pred_check
          %p370 = pneg %p263
        $region46: #{jina_v3_wrapper_forward.1} parent=11 // pred_check_branch
          %372 = sbr.rel (%p370) target = $region48
        $region47: #{jina_v3_wrapper_forward.1} parent=11 // pred_region
          _
        $region48: #{jina_v3_wrapper_forward.1} parent=11 // pred_fallthru
          _
        // Predicated region
        $region49: #{jina_v3_wrapper_forward.1} parent=11 // pred_check
          %p373 = pneg %p284
        $region50: #{jina_v3_wrapper_forward.1} parent=11 // pred_check_branch
          %375 = sbr.rel (%p373) target = $region52
        $region51: #{jina_v3_wrapper_forward.1} parent=11 // pred_region
          _
        $region52: #{jina_v3_wrapper_forward.1} parent=11 // pred_fallthru
          _
        // Predicated region
        $region53: #{jina_v3_wrapper_forward.1} parent=11 // pred_check
          %p376 = pneg %p305
        $region54: #{jina_v3_wrapper_forward.1} parent=11 // pred_check_branch
          %378 = sbr.rel (%p376) target = $region56
        $region55: #{jina_v3_wrapper_forward.1} parent=11 // pred_region
          _
        $region56: #{jina_v3_wrapper_forward.1} parent=11 // pred_fallthru
          _
      $region12: #{jina_v3_wrapper_forward.1} parent=5 // pred_fallthru
        _
      %p379 = scmp.lt.s32.totalorder %s22, 2
      // Predicated region
      $region57: #{jina_v3_wrapper_forward.1} parent=5 // pred_check
        %p380 = pneg %p379
      $region58: #{jina_v3_wrapper_forward.1} parent=5 // pred_check_branch
        %382 = sbr.rel (%p380) target = $region60
      $region59: #{jina_v3_wrapper_forward.1} parent=5 // pred_region
        // Predicated region
        $region61: #{jina_v3_wrapper_forward.1} parent=59 // pred_check
          %p383 = pneg %p42
        $region62: #{jina_v3_wrapper_forward.1} parent=59 // pred_check_branch
          %385 = sbr.rel (%p383) target = $region64
        $region63: #{jina_v3_wrapper_forward.1} parent=59 // pred_region
          %p386 = scmp.lt.s32.totalorder %s22, 1
          %s387 = scalar_select %p386, %s22, 1
          %s388 = smul.addr %s387, 8
          %s389 = scalar_lea.vmem %s0, %s388
        $region64: #{jina_v3_wrapper_forward.1} parent=59 // pred_fallthru
          _
        // Predicated region
        $region65: #{jina_v3_wrapper_forward.1} parent=59 // pred_check
          %p390 = pneg %p68
        $region66: #{jina_v3_wrapper_forward.1} parent=59 // pred_check_branch
          %392 = sbr.rel (%p390) target = $region68
        $region67: #{jina_v3_wrapper_forward.1} parent=59 // pred_region
          %p393 = scmp.lt.s32.totalorder %s22, 1
          %s394 = scalar_select %p393, %s22, 1
          %s395 = scalar_lea.vmem %s1, %s394
        $region68: #{jina_v3_wrapper_forward.1} parent=59 // pred_fallthru
          _
      $region60: #{jina_v3_wrapper_forward.1} parent=5 // pred_fallthru
        _
      %p396 = scmp.le.s32.totalorder 1, %s22
      %p397 = scmp.lt.s32.totalorder %s22, 3
      %p398 = pnand %p396, %p397
      %p399 = pneg %p398
      // Predicated region
      $region69: #{jina_v3_wrapper_forward.1} parent=5 // pred_check
        _
      $region70: #{jina_v3_wrapper_forward.1} parent=5 // pred_check_branch
        %401 = sbr.rel (%p398) target = $region72
      $region71: #{jina_v3_wrapper_forward.1} parent=5 // pred_region
        %s402 = ssub.s32 %s22, 1
        %p403 = scmp.lt.s32.totalorder %s27, 1
        %s404 = scalar_select %p403, %s27, 1
        %s405 = smul.addr %s404, 8
        %s406 = scalar_lea.vmem %s0, %s405
        %p407 = pneg %p48
        %p408 = pneg %p45
        %p409 = scmp.lt.s32.totalorder %s27, 1
        %s410 = scalar_select %p409, %s27, 1
        %s411 = scalar_lea.vmem %s1, %s410
        %p412 = pneg %p74
        %p413 = pneg %p71
        %p414 = pneg %p95
        %p415 = pneg %p92
        %p416 = pneg %p116
        %p417 = pneg %p113
        %p418 = pneg %p137
        %p419 = pneg %p134
        %p420 = pneg %p158
        %p421 = pneg %p155
        %p422 = pneg %p179
        %p423 = pneg %p176
        %p424 = pneg %p200
        %p425 = pneg %p197
        %p426 = pneg %p221
        %p427 = pneg %p218
        %p428 = pneg %p242
        %p429 = pneg %p239
        %p430 = pneg %p263
        %p431 = pneg %p260
        %p432 = pneg %p284
        %p433 = pneg %p281
        %p434 = pneg %p305
        %p435 = pneg %p302
        %p436 = pneg %p331
        %p437 = pneg %p328
        %s438 = sand.u32 %s318, 1
        %s439 = scalar_lea.sflag [#allocation3], %s438
        %s440 = sand.u32 %s318, 1
        %s441 = scalar_lea.vmem [#allocation2], %s440
        %p442 = scmp.lt.s32.totalorder %s27, 1
        %s443 = scalar_select %p442, %s27, 1
        %s444 = smul.addr %s443, 8
        %s445 = scalar_lea.vmem %s0, %s444
        %p446 = scmp.lt.s32.totalorder %s27, 1
        %s447 = scalar_select %p446, %s27, 1
        %s448 = scalar_lea.vmem %s1, %s447
        %v450 = vld [vmem:[%s445] sm:$0xff]
        %v451 = vld [vmem:[%s448] sm:$0x1]
        %v452 = vlaneseq
        %v453 = vand.u32 %v452, 127
        %454 = vset.pattern.permute.xlu0 0
        %455 = vperm.xlu0 %454, %v450
        %v456 = vpop.permute.xlu0 %455
        %vm457 = vcmp.eq.s32.totalorder %v453, %v456
        %v458 = vsel %vm457, 1, 0
        %v459 = vcvt.s32.f32 %v458
        %v460 = vld [vmem:[%s2] sm:$0xff]
        %v461 = vld [vmem:[%s2 + $0x8] sm:$0xff]
        %v462 = vld [vmem:[%s2 + $0x10] sm:$0xff]
        %v463 = vld [vmem:[%s2 + $0x18] sm:$0xff]
        %v464 = vld [vmem:[%s2 + $0x20] sm:$0xff]
        %v465 = vld [vmem:[%s2 + $0x28] sm:$0xff]
        %v466 = vld [vmem:[%s2 + $0x30] sm:$0xff]
        %v467 = vld [vmem:[%s2 + $0x38] sm:$0xff]
        %vm468 = vcmask 523264
        %v470 = vsel %vm468, %v459, 0
        %472 = vmatpush.msra.mxu0 0.0
        %473 = vmatpush.msra.mxu0 0.0
        %474 = vmatpush.msra.mxu0 0.0
        %475 = vmatpush.msra.mxu0 0.0
        %476 = vmatpush.msra.mxu0 0.0
        %477 = vmatpush.msra.mxu0 0.0
        %478 = vmatpush.msra.mxu0 0.0
        %479 = vmatpush.msra.mxu0 0.0
        %480 = vmatpush.msra.mxu0 %v467
        %481 = vmatpush.msra.mxu0 %v466
        %482 = vmatpush.msra.mxu0 %v465
        %483 = vmatpush.msra.mxu0 %v464
        %484 = vmatpush.msra.mxu0 %v463
        %485 = vmatpush.msra.mxu0 %v462
        %486 = vmatpush.msra.mxu0 %v461
        %487 = vmatpush.msra.mxu0 %v460
        %488 = vmatmul.f32.gmra.mxu0 %v470
        %v489 = vpop.f32.mrf.mxu0
        %v490 = vadd.f32 0.0, %v489
        %491 = vdwg.mxu0
        %v492 = vld [vmem:[%s3] sm:$0x1]
        %v493 = vld [vmem:[%s4] sm:$0x1]
        %494 = vadd.xlane.f32.xlu0 %v490
        %v495 = vpop.xlane.xlu0 %494
        %v496 = vrcp.pop 128.0
        %v497 = vmul.f32 128.0, %v496
        %v498 = vsub.f32 1.0, %v497
        %v499 = vmul.f32 %v496, %v498
        %v500 = vadd.f32 %v496, %v499
        %vm501 = vweird.f32 %v496
        %v502 = vsel %vm501, %v496, %v500
        %v503 = vmul.f32 %v495, %v502
        %v504 = vsub.f32 %v490, %v503
        %v505 = vmul.f32 %v504, %v504
        %506 = vadd.xlane.f32.xlu0 %v505
        %v507 = vpop.xlane.xlu0 %506
        %v508 = vmul.f32 %v507, %v502
        %v509 = vadd.f32 %v508, 1e-05
        %v510 = vrsqrt.pop %v509
        %v511 = vmul.f32 %v510, %v509
        %v512 = vmul.f32 %v511, %v510
        %v513 = vmul.f32 0.5, %v512
        %v514 = vsub.f32 1.5, %v513
        %v515 = vmul.f32 %v510, %v514
        %vm516 = vweird.f32 %v509
        %vm517 = vweird.f32 %v510
        %vm518 = vmor %vm516, %vm517
        %v519 = vsel %vm518, %v510, %v515
        %v520 = vmul.f32 %v504, %v519
        %v522 = vperm.slane %v492, 0
        %v524 = vmul.f32 %v520, %v522
        %v526 = vperm.slane %v493, 0
        %v528 = vadd.f32 %v524, %v526
        %v529 = vpack.c.bf16 %v528, %v528
        %v530 = vld [vmem:[%s5] sm:$0xff]
        %v531 = vld [vmem:[%s5 + $0x8] sm:$0xf]
        %v532 = vld [vmem:[%s5 + $0xc] sm:$0xff]
        %v533 = vld [vmem:[%s5 + $0x14] sm:$0xf]
        %v534 = vld [vmem:[%s5 + $0x18] sm:$0xff]
        %v535 = vld [vmem:[%s5 + $0x20] sm:$0xf]
        %v536 = vld [vmem:[%s5 + $0x24] sm:$0xff]
        %v537 = vld [vmem:[%s5 + $0x2c] sm:$0xf]
        %v538 = vld [vmem:[%s5 + $0x30] sm:$0xff]
        %v539 = vld [vmem:[%s5 + $0x38] sm:$0xf]
        %v540 = vld [vmem:[%s5 + $0x3c] sm:$0xff]
        %v541 = vld [vmem:[%s5 + $0x44] sm:$0xf]
        %v542 = vld [vmem:[%s5 + $0x48] sm:$0xff]
        %v543 = vld [vmem:[%s5 + $0x50] sm:$0xf]
        %v544 = vld [vmem:[%s5 + $0x54] sm:$0xff]
        %v545 = vld [vmem:[%s5 + $0x5c] sm:$0xf]
        %v546 = vld [vmem:[%s5 + $0x60] sm:$0xff]
        %v547 = vld [vmem:[%s5 + $0x68] sm:$0xf]
        %v548 = vld [vmem:[%s5 + $0x6c] sm:$0xff]
        %v549 = vld [vmem:[%s5 + $0x74] sm:$0xf]
        %v550 = vld [vmem:[%s5 + $0x78] sm:$0xff]
        %v551 = vld [vmem:[%s5 + $0x80] sm:$0xf]
        %v552 = vld [vmem:[%s5 + $0x84] sm:$0xff]
        %v553 = vld [vmem:[%s5 + $0x8c] sm:$0xf]
        %v554 = vld [vmem:[%s5 + $0x90] sm:$0xff]
        %v555 = vld [vmem:[%s5 + $0x98] sm:$0xf]
        %v556 = vld [vmem:[%s5 + $0x9c] sm:$0xff]
        %v557 = vld [vmem:[%s5 + $0xa4] sm:$0xf]
        %v558 = vld [vmem:[%s5 + $0xa8] sm:$0xff]
        %v559 = vld [vmem:[%s5 + $0xb0] sm:$0xf]
        %v560 = vld [vmem:[%s5 + $0xb4] sm:$0xff]
        %v561 = vld [vmem:[%s5 + $0xbc] sm:$0xf]
        %v594 = vunpack.c.l.b16 %v530
        %v595 = vunpack.c.h.b16 %v530
        %v596 = vunpack.c.l.b16 %v531
        %v597 = vunpack.c.l.b16 %v532
        %v598 = vunpack.c.h.b16 %v532
        %v599 = vunpack.c.l.b16 %v533
        %v600 = vunpack.c.l.b16 %v534
        %v601 = vunpack.c.h.b16 %v534
        %v602 = vunpack.c.l.b16 %v535
        %v603 = vunpack.c.l.b16 %v536
        %v604 = vunpack.c.h.b16 %v536
        %v605 = vunpack.c.l.b16 %v537
        %v606 = vunpack.c.l.b16 %v538
        %v607 = vunpack.c.h.b16 %v538
        %v608 = vunpack.c.l.b16 %v539
        %v609 = vunpack.c.l.b16 %v540
        %v610 = vunpack.c.h.b16 %v540
        %v611 = vunpack.c.l.b16 %v541
        %v612 = vunpack.c.l.b16 %v542
        %v613 = vunpack.c.h.b16 %v542
        %v614 = vunpack.c.l.b16 %v543
        %v615 = vunpack.c.l.b16 %v544
        %v616 = vunpack.c.h.b16 %v544
        %v617 = vunpack.c.l.b16 %v545
        %v618 = vunpack.c.l.b16 %v546
        %v619 = vunpack.c.h.b16 %v546
        %v620 = vunpack.c.l.b16 %v547
        %v621 = vunpack.c.l.b16 %v548
        %v622 = vunpack.c.h.b16 %v548
        %v623 = vunpack.c.l.b16 %v549
        %v624 = vunpack.c.l.b16 %v550
        %v625 = vunpack.c.h.b16 %v550
        %v626 = vunpack.c.l.b16 %v551
        %v627 = vunpack.c.l.b16 %v552
        %v628 = vunpack.c.h.b16 %v552
        %v629 = vunpack.c.l.b16 %v553
        %v630 = vunpack.c.l.b16 %v554
        %v631 = vunpack.c.h.b16 %v554
        %v632 = vunpack.c.l.b16 %v555
        %v633 = vunpack.c.l.b16 %v556
        %v634 = vunpack.c.h.b16 %v556
        %v635 = vunpack.c.l.b16 %v557
        %v636 = vunpack.c.l.b16 %v558
        %v637 = vunpack.c.h.b16 %v558
        %v638 = vunpack.c.l.b16 %v559
        %v639 = vunpack.c.l.b16 %v560
        %v640 = vunpack.c.h.b16 %v560
        %v641 = vunpack.c.l.b16 %v561
        %v642 = vpack.c.b16 %v597, %v594
        %v643 = vpack.c.b16 %v598, %v595
        %v644 = vpack.c.b16 %v599, %v596
        %v645 = vpack.c.b16 %v603, %v600
        %v646 = vpack.c.b16 %v604, %v601
        %v647 = vpack.c.b16 %v605, %v602
        %v648 = vpack.c.b16 %v609, %v606
        %v649 = vpack.c.b16 %v610, %v607
        %v650 = vpack.c.b16 %v611, %v608
        %v651 = vpack.c.b16 %v615, %v612
        %v652 = vpack.c.b16 %v616, %v613
        %v653 = vpack.c.b16 %v617, %v614
        %v654 = vpack.c.b16 %v621, %v618
        %v655 = vpack.c.b16 %v622, %v619
        %v656 = vpack.c.b16 %v623, %v620
        %v657 = vpack.c.b16 %v627, %v624
        %v658 = vpack.c.b16 %v628, %v625
        %v659 = vpack.c.b16 %v629, %v626
        %v660 = vpack.c.b16 %v633, %v630
        %v661 = vpack.c.b16 %v634, %v631
        %v662 = vpack.c.b16 %v635, %v632
        %v663 = vpack.c.b16 %v639, %v636
        %v664 = vpack.c.b16 %v640, %v637
        %v665 = vpack.c.b16 %v641, %v638
        %690 = vmatpush.bf16.msra.mxu0 %v663
        %691 = vmatpush.bf16.msra.mxu0 %v660
        %692 = vmatpush.bf16.msra.mxu0 %v657
        %693 = vmatpush.bf16.msra.mxu0 %v654
        %694 = vmatpush.bf16.msra.mxu0 %v651
        %695 = vmatpush.bf16.msra.mxu0 %v648
        %696 = vmatpush.bf16.msra.mxu0 %v645
        %697 = vmatpush.bf16.msra.mxu0 %v642
        %698 = vmatmul.bf16.gmra.mxu0 %v529
        %v699 = vpop.f32.mrf.mxu0
        %v700 = vadd.f32 0.0, %v699
        %v701 = vpop.f32.mrf.mxu0
        %702 = vdwg.mxu0
        %703 = vmatpush.bf16.msra.mxu0 %v664
        %704 = vmatpush.bf16.msra.mxu0 %v661
        %705 = vmatpush.bf16.msra.mxu0 %v658
        %706 = vmatpush.bf16.msra.mxu0 %v655
        %707 = vmatpush.bf16.msra.mxu0 %v652
        %708 = vmatpush.bf16.msra.mxu0 %v649
        %709 = vmatpush.bf16.msra.mxu0 %v646
        %710 = vmatpush.bf16.msra.mxu0 %v643
        %711 = vmatmul.bf16.gmra.mxu0 %v529
        %v712 = vpop.f32.mrf.mxu0
        %v713 = vadd.f32 0.0, %v712
        %v714 = vpop.f32.mrf.mxu0
        %715 = vdwg.mxu0
        %716 = vmatpush.bf16.msra.mxu0 %v665
        %717 = vmatpush.bf16.msra.mxu0 %v662
        %718 = vmatpush.bf16.msra.mxu0 %v659
        %719 = vmatpush.bf16.msra.mxu0 %v656
        %720 = vmatpush.bf16.msra.mxu0 %v653
        %721 = vmatpush.bf16.msra.mxu0 %v650
        %722 = vmatpush.bf16.msra.mxu0 %v647
        %723 = vmatpush.bf16.msra.mxu0 %v644
        %724 = vmatmul.bf16.gmra.mxu0 %v529
        %v725 = vpop.f32.mrf.mxu0
        %v726 = vadd.f32 0.0, %v725
        %v727 = vpop.f32.mrf.mxu0
        %728 = vdwg.mxu0
        %v729 = vpack.c.bf16 %v700, %v700
        %v730 = vpack.c.bf16 %v713, %v713
        %731 = vmatpush.bf16.xpose.msra.mxu0 0
        %732 = vmatpush.bf16.xpose.msra.mxu0 0
        %733 = vmatpush.bf16.xpose.msra.mxu0 0
        %734 = vmatpush.bf16.xpose.msra.mxu0 0
        %735 = vmatpush.bf16.xpose.msra.mxu0 0
        %736 = vmatpush.bf16.xpose.msra.mxu0 0
        %737 = vmatpush.bf16.xpose.msra.mxu0 0
        %738 = vmatpush.bf16.xpose.msra.mxu0 %v730
        %739 = vmatmul.bf16.gmra.mxu0 %v729
        %v740 = vpop.f32.mrf.mxu0
        %v741 = vadd.f32 0.0, %v740
        %v742 = vpop.f32.mrf.mxu0
        %743 = vdwg.mxu0
        %vm744 = vcmp.gt.f32.partialorder %v451, 0.5
        %v745 = vsel %vm744, 1, 0
        %v746 = vperm.slane %v745, 0
        %vm747 = vcmp.eq.s32.totalorder %v746, 1
        %v748 = vsel %vm747, %v741, -1e+30
        %vm749 = vcmask 64512
        %v750 = vsel %vm749, %v748, -inf
        %751 = vmax.xlane.f32.xlu0 %v750
        %v752 = vpop.xlane.xlu0 %751
        %v753 = vsub.f32 %v748, %v752
        %v754 = vmul.f32 %v753, 1.442695
        %v755 = vpow.pop %v754
        %v756 = vsel %vm749, %v755, 0.0
        %757 = vadd.xlane.f32.xlu0 %v756
        %v758 = vpop.xlane.xlu0 %757
        %v759 = vrcp.pop %v758
        %v760 = vmul.f32 %v755, %v759
        %v761 = vpack.c.bf16 %v760, %v760
        %v762 = vpack.c.bf16 %v726, %v726
        %v764 = vsel %vm749, %v761, 0
        %vm766 = vcmask 1043456
        %v768 = vsel %vm766, %v762, 0
        %770 = vmatpush.bf16.msra.mxu0 0
        %771 = vmatpush.bf16.msra.mxu0 0
        %772 = vmatpush.bf16.msra.mxu0 0
        %773 = vmatpush.bf16.msra.mxu0 0
        %774 = vmatpush.bf16.msra.mxu0 0
        %775 = vmatpush.bf16.msra.mxu0 0
        %776 = vmatpush.bf16.msra.mxu0 0
        %777 = vmatpush.bf16.msra.mxu0 %v768
        %778 = vmatmul.bf16.gmra.mxu0 %v764
        %v779 = vpop.f32.mrf.mxu0
        %v780 = vadd.f32 0.0, %v779
        %v781 = vpop.f32.mrf.mxu0
        %782 = vdwg.mxu0
        %v783 = vpack.c.bf16 %v780, %v780
        %v784 = vld [vmem:[%s6] sm:$0xf]
        %v785 = vld [vmem:[%s6 + $0x4] sm:$0xf]
        %v786 = vld [vmem:[%s6 + $0x8] sm:$0xf]
        %v787 = vld [vmem:[%s6 + $0xc] sm:$0xf]
        %v788 = vld [vmem:[%s6 + $0x10] sm:$0xf]
        %v789 = vld [vmem:[%s6 + $0x14] sm:$0xf]
        %v790 = vld [vmem:[%s6 + $0x18] sm:$0xf]
        %v791 = vld [vmem:[%s6 + $0x1c] sm:$0xf]
        %v792 = vld [vmem:[%s6 + $0x20] sm:$0xf]
        %v793 = vld [vmem:[%s6 + $0x24] sm:$0xf]
        %v794 = vld [vmem:[%s6 + $0x28] sm:$0xf]
        %v795 = vld [vmem:[%s6 + $0x2c] sm:$0xf]
        %v796 = vld [vmem:[%s6 + $0x30] sm:$0xf]
        %v797 = vld [vmem:[%s6 + $0x34] sm:$0xf]
        %v798 = vld [vmem:[%s6 + $0x38] sm:$0xf]
        %v799 = vld [vmem:[%s6 + $0x3c] sm:$0xf]
        %v816 = vunpack.c.l.b16 %v784
        %v817 = vunpack.c.l.b16 %v785
        %v818 = vunpack.c.l.b16 %v786
        %v819 = vunpack.c.l.b16 %v787
        %v820 = vunpack.c.l.b16 %v788
        %v821 = vunpack.c.l.b16 %v789
        %v822 = vunpack.c.l.b16 %v790
        %v823 = vunpack.c.l.b16 %v791
        %v824 = vunpack.c.l.b16 %v792
        %v825 = vunpack.c.l.b16 %v793
        %v826 = vunpack.c.l.b16 %v794
        %v827 = vunpack.c.l.b16 %v795
        %v828 = vunpack.c.l.b16 %v796
        %v829 = vunpack.c.l.b16 %v797
        %v830 = vunpack.c.l.b16 %v798
        %v831 = vunpack.c.l.b16 %v799
        %v832 = vpack.c.b16 %v817, %v816
        %v833 = vpack.c.b16 %v819, %v818
        %v834 = vpack.c.b16 %v821, %v820
        %v835 = vpack.c.b16 %v823, %v822
        %v836 = vpack.c.b16 %v825, %v824
        %v837 = vpack.c.b16 %v827, %v826
        %v838 = vpack.c.b16 %v829, %v828
        %v839 = vpack.c.b16 %v831, %v830
        %848 = vmatpush.bf16.msra.mxu0 %v839
        %849 = vmatpush.bf16.msra.mxu0 %v838
        %850 = vmatpush.bf16.msra.mxu0 %v837
        %851 = vmatpush.bf16.msra.mxu0 %v836
        %852 = vmatpush.bf16.msra.mxu0 %v835
        %853 = vmatpush.bf16.msra.mxu0 %v834
        %854 = vmatpush.bf16.msra.mxu0 %v833
        %855 = vmatpush.bf16.msra.mxu0 %v832
        %856 = vmatmul.bf16.gmra.mxu0 %v783
        %v857 = vpop.f32.mrf.mxu0
        %v858 = vadd.f32 %v528, %v857
        %v859 = vpop.f32.mrf.mxu0
        %860 = vdwg.mxu0
        %v861 = vld [vmem:[%s7] sm:$0x1]
        %v862 = vld [vmem:[%s8] sm:$0x1]
        %863 = vadd.xlane.f32.xlu0 %v858
        %v864 = vpop.xlane.xlu0 %863
        %v865 = vmul.f32 %v864, %v502
        %v866 = vsub.f32 %v858, %v865
        %v867 = vmul.f32 %v866, %v866
        %868 = vadd.xlane.f32.xlu0 %v867
        %v869 = vpop.xlane.xlu0 %868
        %v870 = vmul.f32 %v869, %v502
        %v871 = vadd.f32 %v870, 1e-05
        %v872 = vrsqrt.pop %v871
        %v873 = vmul.f32 %v872, %v871
        %v874 = vmul.f32 %v873, %v872
        %v875 = vmul.f32 0.5, %v874
        %v876 = vsub.f32 1.5, %v875
        %v877 = vmul.f32 %v872, %v876
        %vm878 = vweird.f32 %v871
        %vm879 = vweird.f32 %v872
        %vm880 = vmor %vm878, %vm879
        %v881 = vsel %vm880, %v872, %v877
        %v882 = vmul.f32 %v866, %v881
        %v884 = vperm.slane %v861, 0
        %v886 = vmul.f32 %v882, %v884
        %v888 = vperm.slane %v862, 0
        %v890 = vadd.f32 %v886, %v888
        %v891 = vpack.c.bf16 %v890, %v890
        %v892 = vld [vmem:[%s9] sm:$0xff]
        %v893 = vld [vmem:[%s9 + $0x8] sm:$0xff]
        %v894 = vld [vmem:[%s9 + $0x10] sm:$0xff]
        %v895 = vld [vmem:[%s9 + $0x18] sm:$0xff]
        %v896 = vld [vmem:[%s9 + $0x20] sm:$0xff]
        %v897 = vld [vmem:[%s9 + $0x28] sm:$0xff]
        %v898 = vld [vmem:[%s9 + $0x30] sm:$0xff]
        %v899 = vld [vmem:[%s9 + $0x38] sm:$0xff]
        %v900 = vld [vmem:[%s9 + $0x40] sm:$0xff]
        %v901 = vld [vmem:[%s9 + $0x48] sm:$0xff]
        %v902 = vld [vmem:[%s9 + $0x50] sm:$0xff]
        %v903 = vld [vmem:[%s9 + $0x58] sm:$0xff]
        %v904 = vld [vmem:[%s9 + $0x60] sm:$0xff]
        %v905 = vld [vmem:[%s9 + $0x68] sm:$0xff]
        %v906 = vld [vmem:[%s9 + $0x70] sm:$0xff]
        %v907 = vld [vmem:[%s9 + $0x78] sm:$0xff]
        %v924 = vunpack.c.l.b16 %v892
        %v925 = vunpack.c.h.b16 %v892
        %v926 = vunpack.c.l.b16 %v893
        %v927 = vunpack.c.h.b16 %v893
        %v928 = vunpack.c.l.b16 %v894
        %v929 = vunpack.c.h.b16 %v894
        %v930 = vunpack.c.l.b16 %v895
        %v931 = vunpack.c.h.b16 %v895
        %v932 = vunpack.c.l.b16 %v896
        %v933 = vunpack.c.h.b16 %v896
        %v934 = vunpack.c.l.b16 %v897
        %v935 = vunpack.c.h.b16 %v897
        %v936 = vunpack.c.l.b16 %v898
        %v937 = vunpack.c.h.b16 %v898
        %v938 = vunpack.c.l.b16 %v899
        %v939 = vunpack.c.h.b16 %v899
        %v940 = vunpack.c.l.b16 %v900
        %v941 = vunpack.c.h.b16 %v900
        %v942 = vunpack.c.l.b16 %v901
        %v943 = vunpack.c.h.b16 %v901
        %v944 = vunpack.c.l.b16 %v902
        %v945 = vunpack.c.h.b16 %v902
        %v946 = vunpack.c.l.b16 %v903
        %v947 = vunpack.c.h.b16 %v903
        %v948 = vunpack.c.l.b16 %v904
        %v949 = vunpack.c.h.b16 %v904
        %v950 = vunpack.c.l.b16 %v905
        %v951 = vunpack.c.h.b16 %v905
        %v952 = vunpack.c.l.b16 %v906
        %v953 = vunpack.c.h.b16 %v906
        %v954 = vunpack.c.l.b16 %v907
        %v955 = vunpack.c.h.b16 %v907
        %v956 = vpack.c.b16 %v926, %v924
        %v957 = vpack.c.b16 %v927, %v925
        %v958 = vpack.c.b16 %v930, %v928
        %v959 = vpack.c.b16 %v931, %v929
        %v960 = vpack.c.b16 %v934, %v932
        %v961 = vpack.c.b16 %v935, %v933
        %v962 = vpack.c.b16 %v938, %v936
        %v963 = vpack.c.b16 %v939, %v937
        %v964 = vpack.c.b16 %v942, %v940
        %v965 = vpack.c.b16 %v943, %v941
        %v966 = vpack.c.b16 %v946, %v944
        %v967 = vpack.c.b16 %v947, %v945
        %v968 = vpack.c.b16 %v950, %v948
        %v969 = vpack.c.b16 %v951, %v949
        %v970 = vpack.c.b16 %v954, %v952
        %v971 = vpack.c.b16 %v955, %v953
        %988 = vmatpush.bf16.msra.mxu0 %v970
        %989 = vmatpush.bf16.msra.mxu0 %v968
        %990 = vmatpush.bf16.msra.mxu0 %v966
        %991 = vmatpush.bf16.msra.mxu0 %v964
        %992 = vmatpush.bf16.msra.mxu0 %v962
        %993 = vmatpush.bf16.msra.mxu0 %v960
        %994 = vmatpush.bf16.msra.mxu0 %v958
        %995 = vmatpush.bf16.msra.mxu0 %v956
        %996 = vmatmul.bf16.gmra.mxu0 %v891
        %v997 = vpop.f32.mrf.mxu0
        %v998 = vadd.f32 0.0, %v997
        %v999 = vpop.f32.mrf.mxu0
        %1000 = vdwg.mxu0
        %1001 = vmatpush.bf16.msra.mxu0 %v971
        %1002 = vmatpush.bf16.msra.mxu0 %v969
        %1003 = vmatpush.bf16.msra.mxu0 %v967
        %1004 = vmatpush.bf16.msra.mxu0 %v965
        %1005 = vmatpush.bf16.msra.mxu0 %v963
        %1006 = vmatpush.bf16.msra.mxu0 %v961
        %1007 = vmatpush.bf16.msra.mxu0 %v959
        %1008 = vmatpush.bf16.msra.mxu0 %v957
        %1009 = vmatmul.bf16.gmra.mxu0 %v891
        %v1010 = vpop.f32.mrf.mxu0
        %v1011 = vadd.f32 0.0, %v1010
        %v1012 = vpop.f32.mrf.mxu0
        %1013 = vdwg.mxu0
        %v1014 = vmul.f32 %v998, 0.5
        %v1015 = vmul.f32 %v1011, 0.5
        %v1016 = vmul.f32 %v998, 0.044715
        %v1017 = vmul.f32 %v1011, 0.044715
        %v1018 = vmul.f32 %v1016, %v998
        %v1019 = vmul.f32 %v1017, %v1011
        %v1020 = vmul.f32 %v1018, %v998
        %v1021 = vmul.f32 %v1019, %v1011
        %v1022 = vadd.f32 %v998, %v1020
        %v1023 = vadd.f32 %v1011, %v1021
        %v1024 = vmul.f32 %v1022, 0.7978846
        %v1025 = vmul.f32 %v1023, 0.7978846
        %v1026 = vtanh.pop %v1024
        %v1027 = vtanh.pop %v1025
        %v1028 = vadd.f32 %v1026, 1.0
        %v1029 = vadd.f32 %v1027, 1.0
        %v1030 = vmul.f32 %v1014, %v1028
        %v1031 = vmul.f32 %v1015, %v1029
        %v1032 = vpack.c.bf16 %v1030, %v1030
        %v1033 = vpack.c.bf16 %v1031, %v1031
        %v1034 = vld [vmem:[%s10] sm:$0xf]
        %v1035 = vld [vmem:[%s10 + $0x4] sm:$0xf]
        %v1036 = vld [vmem:[%s10 + $0x8] sm:$0xf]
        %v1037 = vld [vmem:[%s10 + $0xc] sm:$0xf]
        %v1038 = vld [vmem:[%s10 + $0x10] sm:$0xf]
        %v1039 = vld [vmem:[%s10 + $0x14] sm:$0xf]
        %v1040 = vld [vmem:[%s10 + $0x18] sm:$0xf]
        %v1041 = vld [vmem:[%s10 + $0x1c] sm:$0xf]
        %v1042 = vld [vmem:[%s10 + $0x20] sm:$0xf]
        %v1043 = vld [vmem:[%s10 + $0x24] sm:$0xf]
        %v1044 = vld [vmem:[%s10 + $0x28] sm:$0xf]
        %v1045 = vld [vmem:[%s10 + $0x2c] sm:$0xf]
        %v1046 = vld [vmem:[%s10 + $0x30] sm:$0xf]
        %v1047 = vld [vmem:[%s10 + $0x34] sm:$0xf]
        %v1048 = vld [vmem:[%s10 + $0x38] sm:$0xf]
        %v1049 = vld [vmem:[%s10 + $0x3c] sm:$0xf]
        %v1050 = vld [vmem:[%s10 + $0x40] sm:$0xf]
        %v1051 = vld [vmem:[%s10 + $0x44] sm:$0xf]
        %v1052 = vld [vmem:[%s10 + $0x48] sm:$0xf]
        %v1053 = vld [vmem:[%s10 + $0x4c] sm:$0xf]
        %v1054 = vld [vmem:[%s10 + $0x50] sm:$0xf]
        %v1055 = vld [vmem:[%s10 + $0x54] sm:$0xf]
        %v1056 = vld [vmem:[%s10 + $0x58] sm:$0xf]
        %v1057 = vld [vmem:[%s10 + $0x5c] sm:$0xf]
        %v1058 = vld [vmem:[%s10 + $0x60] sm:$0xf]
        %v1059 = vld [vmem:[%s10 + $0x64] sm:$0xf]
        %v1060 = vld [vmem:[%s10 + $0x68] sm:$0xf]
        %v1061 = vld [vmem:[%s10 + $0x6c] sm:$0xf]
        %v1062 = vld [vmem:[%s10 + $0x70] sm:$0xf]
        %v1063 = vld [vmem:[%s10 + $0x74] sm:$0xf]
        %v1064 = vld [vmem:[%s10 + $0x78] sm:$0xf]
        %v1065 = vld [vmem:[%s10 + $0x7c] sm:$0xf]
        %v1098 = vunpack.c.l.b16 %v1034
        %v1099 = vunpack.c.l.b16 %v1035
        %v1100 = vunpack.c.l.b16 %v1036
        %v1101 = vunpack.c.l.b16 %v1037
        %v1102 = vunpack.c.l.b16 %v1038
        %v1103 = vunpack.c.l.b16 %v1039
        %v1104 = vunpack.c.l.b16 %v1040
        %v1105 = vunpack.c.l.b16 %v1041
        %v1106 = vunpack.c.l.b16 %v1042
        %v1107 = vunpack.c.l.b16 %v1043
        %v1108 = vunpack.c.l.b16 %v1044
        %v1109 = vunpack.c.l.b16 %v1045
        %v1110 = vunpack.c.l.b16 %v1046
        %v1111 = vunpack.c.l.b16 %v1047
        %v1112 = vunpack.c.l.b16 %v1048
        %v1113 = vunpack.c.l.b16 %v1049
        %v1114 = vunpack.c.l.b16 %v1050
        %v1115 = vunpack.c.l.b16 %v1051
        %v1116 = vunpack.c.l.b16 %v1052
        %v1117 = vunpack.c.l.b16 %v1053
        %v1118 = vunpack.c.l.b16 %v1054
        %v1119 = vunpack.c.l.b16 %v1055
        %v1120 = vunpack.c.l.b16 %v1056
        %v1121 = vunpack.c.l.b16 %v1057
        %v1122 = vunpack.c.l.b16 %v1058
        %v1123 = vunpack.c.l.b16 %v1059
        %v1124 = vunpack.c.l.b16 %v1060
        %v1125 = vunpack.c.l.b16 %v1061
        %v1126 = vunpack.c.l.b16 %v1062
        %v1127 = vunpack.c.l.b16 %v1063
        %v1128 = vunpack.c.l.b16 %v1064
        %v1129 = vunpack.c.l.b16 %v1065
        %v1130 = vpack.c.b16 %v1099, %v1098
        %v1131 = vpack.c.b16 %v1101, %v1100
        %v1132 = vpack.c.b16 %v1103, %v1102
        %v1133 = vpack.c.b16 %v1105, %v1104
        %v1134 = vpack.c.b16 %v1107, %v1106
        %v1135 = vpack.c.b16 %v1109, %v1108
        %v1136 = vpack.c.b16 %v1111, %v1110
        %v1137 = vpack.c.b16 %v1113, %v1112
        %v1138 = vpack.c.b16 %v1115, %v1114
        %v1139 = vpack.c.b16 %v1117, %v1116
        %v1140 = vpack.c.b16 %v1119, %v1118
        %v1141 = vpack.c.b16 %v1121, %v1120
        %v1142 = vpack.c.b16 %v1123, %v1122
        %v1143 = vpack.c.b16 %v1125, %v1124
        %v1144 = vpack.c.b16 %v1127, %v1126
        %v1145 = vpack.c.b16 %v1129, %v1128
        %1162 = vmatpush.bf16.msra.mxu0 %v1137
        %1163 = vmatpush.bf16.msra.mxu0 %v1136
        %1164 = vmatpush.bf16.msra.mxu0 %v1135
        %1165 = vmatpush.bf16.msra.mxu0 %v1134
        %1166 = vmatpush.bf16.msra.mxu0 %v1133
        %1167 = vmatpush.bf16.msra.mxu0 %v1132
        %1168 = vmatpush.bf16.msra.mxu0 %v1131
        %1169 = vmatpush.bf16.msra.mxu0 %v1130
        %1170 = vmatmul.bf16.gmra.mxu0 %v1032
        %v1171 = vpop.f32.mrf.mxu0
        %v1172 = vadd.f32 %v890, %v1171
        %v1173 = vpop.f32.mrf.mxu0
        %1174 = vdwg.mxu0
        %1175 = vmatpush.bf16.msra.mxu0 %v1145
        %1176 = vmatpush.bf16.msra.mxu0 %v1144
        %1177 = vmatpush.bf16.msra.mxu0 %v1143
        %1178 = vmatpush.bf16.msra.mxu0 %v1142
        %1179 = vmatpush.bf16.msra.mxu0 %v1141
        %1180 = vmatpush.bf16.msra.mxu0 %v1140
        %1181 = vmatpush.bf16.msra.mxu0 %v1139
        %1182 = vmatpush.bf16.msra.mxu0 %v1138
        %1183 = vmatmul.bf16.gmra.mxu0 %v1033
        %v1184 = vpop.f32.mrf.mxu0
        %v1185 = vadd.f32 %v1172, %v1184
        %v1186 = vpop.f32.mrf.mxu0
        %1187 = vdwg.mxu0
        %v1188 = vld [vmem:[%s11] sm:$0x1]
        %v1189 = vld [vmem:[%s12] sm:$0x1]
        %1190 = vadd.xlane.f32.xlu0 %v1185
        %v1191 = vpop.xlane.xlu0 %1190
        %v1192 = vmul.f32 %v1191, %v502
        %v1193 = vsub.f32 %v1185, %v1192
        %v1194 = vmul.f32 %v1193, %v1193
        %1195 = vadd.xlane.f32.xlu0 %v1194
        %v1196 = vpop.xlane.xlu0 %1195
        %v1197 = vmul.f32 %v1196, %v502
        %v1198 = vadd.f32 %v1197, 1e-05
        %v1199 = vrsqrt.pop %v1198
        %v1200 = vmul.f32 %v1199, %v1198
        %v1201 = vmul.f32 %v1200, %v1199
        %v1202 = vmul.f32 0.5, %v1201
        %v1203 = vsub.f32 1.5, %v1202
        %v1204 = vmul.f32 %v1199, %v1203
        %vm1205 = vweird.f32 %v1198
        %vm1206 = vweird.f32 %v1199
        %vm1207 = vmor %vm1205, %vm1206
        %v1208 = vsel %vm1207, %v1199, %v1204
        %v1209 = vmul.f32 %v1193, %v1208
        %v1211 = vperm.slane %v1188, 0
        %v1213 = vmul.f32 %v1209, %v1211
        %v1215 = vperm.slane %v1189, 0
        %v1217 = vadd.f32 %v1213, %v1215
        %v1219 = vsel %vm749, %v451, 0
        %1221 = vmatpush.msra.mxu0 0.0
        %1222 = vmatpush.msra.mxu0 0.0
        %1223 = vmatpush.msra.mxu0 0.0
        %1224 = vmatpush.msra.mxu0 0.0
        %1225 = vmatpush.msra.mxu0 0.0
        %1226 = vmatpush.msra.mxu0 0.0
        %1227 = vmatpush.msra.mxu0 0.0
        %1228 = vmatpush.msra.mxu0 0.0
        %1229 = vmatpush.msra.mxu0 0.0
        %1230 = vmatpush.msra.mxu0 0.0
        %1231 = vmatpush.msra.mxu0 0.0
        %1232 = vmatpush.msra.mxu0 0.0
        %1233 = vmatpush.msra.mxu0 0.0
        %1234 = vmatpush.msra.mxu0 0.0
        %1235 = vmatpush.msra.mxu0 0.0
        %1236 = vmatpush.msra.mxu0 %v1217
        %1237 = vmatmul.f32.gmra.mxu0 %v1219
        %v1238 = vpop.f32.mrf.mxu0
        %v1239 = vadd.f32 0.0, %v1238
        %1240 = vdwg.mxu0
        %vm1241 = vcmask 57344
        %v1242 = vsel %vm1241, %v451, 0.0
        %1243 = vadd.xlane.f32.xlu0 %v1242
        %v1244 = vpop.xlane.xlu0 %1243
        %v1245 = vrot.slane %v1244, 4
        %v1246 = vadd.f32 %v1244, %v1245
        %v1247 = vrot.slane %v1246, 2
        %v1248 = vadd.f32 %v1246, %v1247
        %v1249 = vrot.slane %v1248, 1
        %v1250 = vadd.f32 %v1248, %v1249
        %s1251 = vtos %v1250
        %s1252 = smax.f32 %s1251, 1.0
        %v1253 = vstv %s1252
        %v1254 = vrcp.pop %v1253
        %v1255 = vmul.f32 %v1253, %v1254
        %v1256 = vsub.f32 1.0, %v1255
        %v1257 = vmul.f32 %v1254, %v1256
        %v1258 = vadd.f32 %v1254, %v1257
        %vm1259 = vweird.f32 %v1253
        %vm1260 = vweird.f32 %v1254
        %vm1261 = vmor %vm1259, %vm1260
        %v1262 = vsel %vm1261, %v1254, %v1258
        %v1263 = vand.u32 2147483647, %v1253
        %vm1264 = vcmp.eq.f32.partialorder %v1263, 8.507059e+37
        %v1265 = vand.u32 %v1253, 2147483648
        %v1266 = vor.u32 1.1754944e-38, %v1265
        %v1267 = vsel %vm1264, %v1266, %v1262
        %v1268 = vmul.f32 %v1239, %v1267
        %1269 = vst [vmem:[%s441] sm:$0x1] %v1268
        %s1270 = sand.u32 %s318, 1
        %s1271 = scalar_lea.sflag [#allocation3], %s1270
        %s1272 = sand.u32 %s318, 1
        %s1273 = scalar_lea.vmem [#allocation2], %s1272
        // Predicated region
        $region73: #{jina_v3_wrapper_forward.1} parent=71 // pred_check
          %p1274 = pneg %p328
        $region74: #{jina_v3_wrapper_forward.1} parent=71 // pred_check_branch
          %1276 = sbr.rel (%p1274) target = $region76
        $region75: #{jina_v3_wrapper_forward.1} parent=71 // pred_region
          %1278 = vsyncadd %s1271, 0
          %s1279 = scalar_lea.hbm %s13, %s27
          %s1281 = sshll.u32 %s1273, 4
          %s1282 = int_to_ptr.vmem [resolvable:$true] %s1281
          %s1283 = sshll.u32 %s1279, 4
          %s1284 = int_to_ptr.hbm [resolvable:$true] %s1283
          %1286 = dma.vmem_to_hbm [thread:$0]  %s1282, 16, %s1284, %s1271
        $region76: #{jina_v3_wrapper_forward.1} parent=71 // pred_fallthru
          _
      $region72: #{jina_v3_wrapper_forward.1} parent=5 // pred_fallthru
        _
      %p1287 = scmp.le.s32.totalorder 2, %s22
      // Predicated region
      $region77: #{jina_v3_wrapper_forward.1} parent=5 // pred_check
        %p1288 = pneg %p1287
      $region78: #{jina_v3_wrapper_forward.1} parent=5 // pred_check_branch
        %1290 = sbr.rel (%p1288) target = $region80
      $region79: #{jina_v3_wrapper_forward.1} parent=5 // pred_region
        %s1291 = ssub.s32 %s22, 2
        // Predicated region
        $region81: #{jina_v3_wrapper_forward.1} parent=79 // pred_check
          %p1292 = pneg %p334
        $region82: #{jina_v3_wrapper_forward.1} parent=79 // pred_check_branch
          %1294 = sbr.rel (%p1292) target = $region84
        $region83: #{jina_v3_wrapper_forward.1} parent=79 // pred_region
          %s1295 = sand.u32 %s319, 1
          %s1296 = scalar_lea.sflag [#allocation3], %s1295
          %s1297 = sand.u32 %s319, 1
          %s1298 = scalar_lea.vmem [#allocation2], %s1297
          %1300 = dma.done %s1296, 16
        $region84: #{jina_v3_wrapper_forward.1} parent=79 // pred_fallthru
          _
      $region80: #{jina_v3_wrapper_forward.1} parent=5 // pred_fallthru
        _
    $region6: #{jina_v3_wrapper_forward.1} parent=1 // loop_footer
      %s26 = sadd.s32 1, %s22
    $region7: #{jina_v3_wrapper_forward.1} parent=1 // loop_footer_branch
      %21 = sbr.rel target = $region3
    $region8: #{jina_v3_wrapper_forward.1} parent=1 // loop_exit
      _
    %1301 = vsyncpa [#allocation3], 1
    %s1302 = scalar_lea.sflag [#allocation3], 1
    %1303 = vsyncpa %s1302, 1

</llo_original>
